<compile_context>
chip_gen: v7x
topology: tpu7x:2x2x1
jax: 0.10.0
libtpu: 0.0.40
codegen_flags: <defaults>
</compile_context>

<pallas_src>
import functools

import jax
import jax.numpy as jnp
from jax.experimental import pallas as pl
from jax.experimental.pallas import tpu as pltpu

DROPOUT = 0.1   # F.dropout(..., training=self.training): identity in eval mode
HID_DIM = 128
OUT_DIM = 64

TILE_M = 256    # destination-row tile (multiple of 128); safe for v7x's 64 MiB VMEM


def _round_up(x, m):
    return (x + m - 1) // m * m


def fused_graphsage_kernel(a_ref, dinv_ref, x_ref, w1_ref, b1_ref, w2_ref, b2_ref,
                           o_ref, h_ref, *, tile_m, a_resident):
    """Both SAGEConv layers fused over grid = (2 phases, num_row_tiles).

    phase 0, tile t:
      agg  = (A[t] @ x) * dinv[t]                              (int8 A widened to bf16, f32 acc)
      h[t] = relu([agg | x[t]] @ [W1_l ; W1_r] + b1)           -> bf16 VMEM scratch
      (dropout = identity in eval mode; no output write)
    phase 1, tile t:
      agg2   = (A[t] @ h) * dinv[t]
      out[t] = [agg2 | h[t]] @ [W2_l ; W2_r] + b2
    """
    phase = pl.program_id(0)
    t = pl.program_id(1)
    row0 = pl.multiple_of(t * tile_m, tile_m)

    # int8 counts -> bf16 for the MXU (exact for small counts); needed by both phases.
    if a_resident:
        a_bf = a_ref[pl.ds(row0, tile_m), :].astype(jnp.bfloat16)
    else:
        a_bf = a_ref[...].astype(jnp.bfloat16)
    dinv = dinv_ref[...]                       # (tile_m, 1) f32 per-destination-row scale

    @pl.when(phase == 0)
    def _layer1():
        x_t = x_ref[pl.ds(row0, tile_m), :]
        agg = jnp.dot(a_bf, x_ref[...], preferred_element_type=jnp.float32) * dinv
        lhs = jnp.concatenate([agg.astype(jnp.bfloat16), x_t], axis=1)
        h = jnp.dot(lhs, w1_ref[...], preferred_element_type=jnp.float32) + b1_ref[...]
        h = jnp.maximum(h, 0.0)
        # TODO(synk): training-mode dropout (p=DROPOUT) would need pltpu.prng_*; eval -> identity.
        h_ref[pl.ds(row0, tile_m), :] = h.astype(jnp.bfloat16)

    @pl.when(phase == 1)
    def _layer2():
        h_t = h_ref[pl.ds(row0, tile_m), :]
        agg2 = jnp.dot(a_bf, h_ref[...], preferred_element_type=jnp.float32) * dinv
        lhs2 = jnp.concatenate([agg2.astype(jnp.bfloat16), h_t], axis=1)
        out = jnp.dot(lhs2, w2_ref[...], preferred_element_type=jnp.float32) + b2_ref[...]
        o_ref[...] = out.astype(o_ref.dtype)


def build_mean_adjacency(edge_index, num_nodes):
    """Dense int8 edge-count matrix + exact f32 inverse in-degree (plain-JAX glue).

    edge_index: (2, E); row 0 = source, row 1 = target.
    counts[i, j] = # edges j->i; deg_inv[i] = 1/in_degree(i) (0 for isolated nodes),
    matching PyG scatter_mean semantics.
    """
    src = edge_index[0]
    dst = edge_index[1]
    counts = jnp.zeros((num_nodes, num_nodes), jnp.int32).at[dst, src].add(1)
    deg = counts.sum(axis=1, keepdims=True).astype(jnp.float32)
    deg_inv = jnp.where(deg > 0, 1.0 / jnp.maximum(deg, 1.0), 0.0)
    # TODO(synk): int8 clips at 127 duplicate edges between one (src,dst) pair; assert on real data.
    return counts.astype(jnp.int8), deg_inv


def graphsage_forward(x, edge_index, params, *, tile_m=TILE_M):
    """Full GraphSAGE forward (eval mode) in a single fused Pallas call."""
    n, in_dim = x.shape
    hid = params["w1_l"].shape[1]
    out_dim = params["w2_l"].shape[1]

    tile_m = min(tile_m, _round_up(n, 128))
    n_pad = _round_up(n, tile_m)
    in_pad = _round_up(in_dim, 128)
    hid_pad = _round_up(hid, 128)
    out_pad = _round_up(out_dim, 128)
    num_tiles = n_pad // tile_m

    # ---- glue (plain JAX): adjacency build, padding to MXU/lane-friendly shapes, bf16 casts ----
    # TODO(synk): for large graphs (E << N^2) replace dense counts with sparse CSR gather/mean
    # driven by PrefetchScalarGridSpec scalar-prefetch indices.
    counts, deg_inv = build_mean_adjacency(edge_index, n)
    a = jnp.pad(counts, ((0, n_pad - n), (0, n_pad - n)))                 # int8, zero-padded
    dinv = jnp.pad(deg_inv, ((0, n_pad - n), (0, 0)))                     # (n_pad, 1) f32
    xp = jnp.pad(x, ((0, n_pad - n), (0, in_pad - in_dim))).astype(jnp.bfloat16)

    # Concatenated weights so each projection pair runs as one 256-wide-K MXU matmul.
    w1l = jnp.pad(params["w1_l"], ((0, in_pad - in_dim), (0, hid_pad - hid)))
    w1r = jnp.pad(params["w1_r"], ((0, in_pad - in_dim), (0, hid_pad - hid)))
    w1 = jnp.concatenate([w1l, w1r], axis=0).astype(jnp.bfloat16)         # (2*in_pad, hid_pad)
    b1 = jnp.pad(params["b1"], ((0, 0), (0, hid_pad - hid)))
    w2l = jnp.pad(params["w2_l"], ((0, hid_pad - hid), (0, out_pad - out_dim)))
    w2r = jnp.pad(params["w2_r"], ((0, hid_pad - hid), (0, out_pad - out_dim)))
    w2 = jnp.concatenate([w2l, w2r], axis=0).astype(jnp.bfloat16)         # (2*hid_pad, out_pad)
    b2 = jnp.pad(params["b2"], ((0, 0), (0, out_pad - out_dim)))

    # ---- VMEM budgeting (bytes), used both to decide A residency and to set the limit ----
    bytes_common = (
        2 * n_pad * in_pad * 2                  # x (bf16, pipeline double-buffers)
        + 2 * (2 * in_pad) * hid_pad * 2        # W1 concat
        + 2 * (2 * hid_pad) * out_pad * 2       # W2 concat
        + 2 * 8 * (hid_pad + out_pad) * 4       # biases (sublane-padded)
        + 2 * tile_m * 128 * 4                  # deg_inv tile (lane-padded)
        + 2 * tile_m * out_pad * 4              # output tile
        + n_pad * hid_pad * 2                   # h scratch (single copy)
        + 2 * tile_m * n_pad * 2                # in-kernel widened bf16 A tile / concat temps
    )
    a_resident_bytes = bytes_common + 2 * n_pad * n_pad       # whole int8 A on-chip
    a_streamed_bytes = bytes_common + 2 * tile_m * n_pad      # int8 A streamed per row tile
    # Keep A resident only if it comfortably fits every generation (v7x has 64 MiB VMEM);
    # residency halves the dominant HBM traffic (A is otherwise read once per phase).
    a_resident = a_resident_bytes <= 40 * 1024 * 1024
    vmem_needed = a_resident_bytes if a_resident else a_streamed_bytes
    vmem_limit = min(max(int(vmem_needed * 1.25) + (4 << 20), 32 << 20), 96 << 20)

    if a_resident:
        a_spec = pl.BlockSpec((n_pad, n_pad), lambda p, t: (0, 0))
    else:
        a_spec = pl.BlockSpec((tile_m, n_pad), lambda p, t: (t, 0))

    # TODO(synk): resident inputs could be pinned to single buffering (pipeline_mode=pl.Buffered(1))
    # to reclaim more VMEM on v7x once verified against the Mosaic lowering.
    resident = lambda p, t: (0, 0)

    kernel = functools.partial(fused_graphsage_kernel, tile_m=tile_m, a_resident=a_resident)

    out_padded = pl.pallas_call(
        kernel,
        out_shape=jax.ShapeDtypeStruct((n_pad, out_pad), jnp.float32),
        grid_spec=pltpu.PrefetchScalarGridSpec(
            num_scalar_prefetch=0,
            grid=(2, num_tiles),                                  # (phase, dst-row tile)
            in_specs=[
                a_spec,                                           # A counts (int8)
                pl.BlockSpec((tile_m, 1), lambda p, t: (t, 0)),   # 1/deg per dst row (f32)
                pl.BlockSpec((n_pad, in_pad), resident),          # x (all source rows, bf16)
                pl.BlockSpec((2 * in_pad, hid_pad), resident),    # [W1_l ; W1_r]
                pl.BlockSpec((1, hid_pad), resident),             # b1
                pl.BlockSpec((2 * hid_pad, out_pad), resident),   # [W2_l ; W2_r]
                pl.BlockSpec((1, out_pad), resident),             # b2
            ],
            # Phase-dependent map: all phase-0 steps alias block 0 (never flushed before
            # phase 1 rewrites it), so phase 0 produces no output HBM traffic at all.
            out_specs=pl.BlockSpec((tile_m, out_pad), lambda p, t: (p * t, 0)),
            scratch_shapes=[
                pltpu.VMEM((n_pad, hid_pad), jnp.bfloat16),       # h (layer-1 activations)
            ],
        ),
        compiler_params=pltpu.CompilerParams(
            # Phase 1 of every tile reads h rows written by phase 0 of *all* tiles, so both
            # axes must stay "arbitrary" (VMEM scratch is per-core).
            # TODO(synk): on v7x (2 TC/chip) split into two pallas_calls (h via HBM) with the
            # tile axis marked "parallel" to use both cores' HBM paths.
            dimension_semantics=("arbitrary", "arbitrary"),
            vmem_limit_bytes=vmem_limit,
        ),
    )(a, dinv, xp, w1, b1, w2, b2)

    return out_padded[:n, :out_dim]


def init_params(key, in_dim, hid_dim=HID_DIM, out_dim=OUT_DIM):
    """Deterministic synthetic parameters (shapes match SAGEConv's lin_l / lin_r)."""
    k1, k2, k3, k4 = jax.random.split(key, 4)
    s1 = 1.0 / jnp.sqrt(in_dim)
    s2 = 1.0 / jnp.sqrt(hid_dim)
    return {
        # layer 1: in_dim -> hid_dim
        "w1_l": jax.random.uniform(k1, (in_dim, hid_dim), jnp.float32, -s1, s1),
        "w1_r": jax.random.uniform(k2, (in_dim, hid_dim), jnp.float32, -s1, s1),
        "b1": jnp.zeros((1, hid_dim), jnp.float32),
        # layer 2: hid_dim -> out_dim
        "w2_l": jax.random.uniform(k3, (hid_dim, out_dim), jnp.float32, -s2, s2),
        "w2_r": jax.random.uniform(k4, (hid_dim, out_dim), jnp.float32, -s2, s2),
        "b2": jnp.zeros((1, out_dim), jnp.float32),
    }


def graphsage_reference(x, edge_index, params):
    """Pure-JAX f32 reference for a loose numerical check."""
    counts, deg_inv = build_mean_adjacency(edge_index, x.shape[0])
    a = counts.astype(jnp.float32) * deg_inv
    h = jnp.maximum(a @ x @ params["w1_l"] + x @ params["w1_r"] + params["b1"], 0.0)
    return a @ h @ params["w2_l"] + h @ params["w2_r"] + params["b2"]


if __name__ == "__main__":
    N, E, IN_DIM = 64, 256, 32

    key = jax.random.PRNGKey(0)
    kx, ks, kd, kp = jax.random.split(key, 4)

    x = jax.random.normal(kx, (N, IN_DIM), jnp.float32)
    src = jax.random.randint(ks, (E,), 0, N, dtype=jnp.int32)
    dst = jax.random.randint(kd, (E,), 0, N, dtype=jnp.int32)
    edge_index = jnp.stack([src, dst])           # (2, E)

    params = init_params(kp, IN_DIM)

    out = jax.jit(graphsage_forward)(x, edge_index, params)
    jax.block_until_ready(out)
    assert out.shape == (N, OUT_DIM) and out.dtype == jnp.float32

    # Loose check vs. f32 reference (kernel feeds the MXU in bf16, accumulates in f32;
    # mean normalization is exact f32 post-matmul scaling).
    ref = graphsage_reference(x, edge_index, params)
    max_err = float(jnp.max(jnp.abs(out - ref)))
    assert max_err < 1e-1, f"max abs err {max_err}"

    print("KERNEL_OK")
</pallas_src>

<mosaic_0001>
module attributes {stable_mosaic.version = 11 : i64} {
  func.func private @main(%arg0: i32) attributes {dimension_semantics = [#tpu.dimension_semantics<core_parallel>], iteration_bounds = array<i64: 2>, tpu.core_type = #tpu.core_type<sc_scalar_subcore>, window_params = []} {
    return
  }
}

module attributes {stable_mosaic.version = 11 : i64} {
  func.func private @main(%arg0: i32) attributes {dimension_semantics = [#tpu.dimension_semantics<core_parallel>], iteration_bounds = array<i64: 2>, tpu.core_type = #tpu.core_type<sc_scalar_subcore>, window_params = []} {
    return
  }
}

module attributes {stable_mosaic.version = 11 : i64} {
  func.func @fused_graphsage_kernel(%arg0: i32, %arg1: i32, %arg2: memref<128x128xi8, #tpu.memory_space<vmem>>, %arg3: memref<128x1xf32, #tpu.memory_space<vmem>>, %arg4: memref<128x128xbf16, #tpu.memory_space<vmem>>, %arg5: memref<256x128xbf16, #tpu.memory_space<vmem>>, %arg6: memref<1x128xf32, #tpu.memory_space<vmem>>, %arg7: memref<256x128xbf16, #tpu.memory_space<vmem>>, %arg8: memref<1x128xf32, #tpu.memory_space<vmem>>, %arg9: memref<128x128xf32, #tpu.memory_space<vmem>>, %arg10: memref<128x128xbf16, #tpu.memory_space<vmem>>) attributes {dimension_semantics = [#tpu.dimension_semantics<arbitrary>, #tpu.dimension_semantics<arbitrary>], iteration_bounds = array<i64: 2, 1>, scalar_prefetch = 0 : i64, scratch_operands = 1 : i64, tpu.core_type = #tpu.core_type<tc>, window_params = [{pipeline_mode = #tpu.pipeline_mode<synchronous>, transform_indices = @transform_0, window_bounds = array<i64: 128, 128>}, {transform_indices = @transform_1, window_bounds = array<i64: 128, 1>}, {pipeline_mode = #tpu.pipeline_mode<synchronous>, transform_indices = @transform_2, window_bounds = array<i64: 128, 128>}, {pipeline_mode = #tpu.pipeline_mode<synchronous>, transform_indices = @transform_3, window_bounds = array<i64: 256, 128>}, {pipeline_mode = #tpu.pipeline_mode<synchronous>, transform_indices = @transform_4, window_bounds = array<i64: 1, 128>}, {pipeline_mode = #tpu.pipeline_mode<synchronous>, transform_indices = @transform_5, window_bounds = array<i64: 256, 128>}, {pipeline_mode = #tpu.pipeline_mode<synchronous>, transform_indices = @transform_6, window_bounds = array<i64: 1, 128>}, {transform_indices = @transform_7, window_bounds = array<i64: 128, 128>}]} {
    %c128_i32 = arith.constant 128 : i32
    %0 = arith.muli %arg1, %c128_i32 : i32
    %1 = tpu.assume_multiple %0, 128 : i32
    %2 = arith.index_cast %1 : i32 to index
    %c0 = arith.constant 0 : index
    %3 = vector.load %arg2[%2, %c0] : memref<128x128xi8, #tpu.memory_space<vmem>>, vector<128x128xi8>
    %4 = arith.sitofp %3 : vector<128x128xi8> to vector<128x128xbf16>
    %c0_0 = arith.constant 0 : index
    %c0_1 = arith.constant 0 : index
    %5 = vector.load %arg3[%c0_0, %c0_1] : memref<128x1xf32, #tpu.memory_space<vmem>>, vector<128x1xf32>
    %c0_i32 = arith.constant 0 : i32
    %6 = arith.cmpi eq, %arg0, %c0_i32 : i32
    %7 = arith.extui %6 : i1 to i32
    %c0_i32_2 = arith.constant 0 : i32
    %8 = arith.cmpi ne, %7, %c0_i32_2 : i32
    scf.if %8 {
      %12 = arith.index_cast %1 : i32 to index
      %c0_4 = arith.constant 0 : index
      %13 = vector.load %arg4[%12, %c0_4] : memref<128x128xbf16, #tpu.memory_space<vmem>>, vector<128x128xbf16>
      %c0_5 = arith.constant 0 : index
      %c0_6 = arith.constant 0 : index
      %14 = vector.load %arg4[%c0_5, %c0_6] : memref<128x128xbf16, #tpu.memory_space<vmem>>, vector<128x128xbf16>
      %cst = arith.constant dense<0.000000e+00> : vector<128x128xf32>
      %15 = tpu.matmul %4, %14, %cst {dimension_numbers = #tpu.dot_dimension_numbers<[1], [0], [0], [1], [0, 0, 1, 1], [], []>} : vector<128x128xbf16>, vector<128x128xbf16>, vector<128x128xf32> -> vector<128x128xf32>
      %16 = vector.broadcast %5 : vector<128x1xf32> to vector<128x128xf32>
      %17 = arith.mulf %15, %16 : vector<128x128xf32>
      %18 = arith.truncf %17 : vector<128x128xf32> to vector<128x128xbf16>
      %19 = tpu.concatenate %18, %13 in 1 : vector<128x128xbf16>, vector<128x128xbf16> -> vector<128x256xbf16>
      %c0_7 = arith.constant 0 : index
      %c0_8 = arith.constant 0 : index
      %20 = vector.load %arg5[%c0_7, %c0_8] : memref<256x128xbf16, #tpu.memory_space<vmem>>, vector<256x128xbf16>
      %cst_9 = arith.constant dense<0.000000e+00> : vector<128x128xf32>
      %21 = tpu.matmul %19, %20, %cst_9 {dimension_numbers = #tpu.dot_dimension_numbers<[1], [0], [0], [1], [0, 0, 1, 1], [], []>} : vector<128x256xbf16>, vector<256x128xbf16>, vector<128x128xf32> -> vector<128x128xf32>
      %c0_10 = arith.constant 0 : index
      %c0_11 = arith.constant 0 : index
      %22 = vector.load %arg6[%c0_10, %c0_11] : memref<1x128xf32, #tpu.memory_space<vmem>>, vector<1x128xf32>
      %23 = vector.broadcast %22 : vector<1x128xf32> to vector<128x128xf32>
      %24 = arith.addf %21, %23 : vector<128x128xf32>
      %cst_12 = arith.constant 0.000000e+00 : f32
      %25 = vector.broadcast %cst_12 : f32 to vector<128x128xf32>
      %26 = arith.maximumf %24, %25 : vector<128x128xf32>
      %27 = arith.truncf %26 : vector<128x128xf32> to vector<128x128xbf16>
      %28 = arith.index_cast %1 : i32 to index
      %c0_13 = arith.constant 0 : index
      %29 = vector.load %arg10[%28, %c0_13] : memref<128x128xbf16, #tpu.memory_space<vmem>>, vector<128x128xbf16>
      tpu.vector_store %arg10[%28, %c0_13], %27 {strides = array<i32>} : memref<128x128xbf16, #tpu.memory_space<vmem>>, vector<128x128xbf16>,
    } else {
    }
    %c1_i32 = arith.constant 1 : i32
    %9 = arith.cmpi eq, %arg0, %c1_i32 : i32
    %10 = arith.extui %9 : i1 to i32
    %c0_i32_3 = arith.constant 0 : i32
    %11 = arith.cmpi ne, %10, %c0_i32_3 : i32
    scf.if %11 {
      %12 = arith.index_cast %1 : i32 to index
      %c0_4 = arith.constant 0 : index
      %13 = vector.load %arg10[%12, %c0_4] : memref<128x128xbf16, #tpu.memory_space<vmem>>, vector<128x128xbf16>
      %c0_5 = arith.constant 0 : index
      %c0_6 = arith.constant 0 : index
      %14 = vector.load %arg10[%c0_5, %c0_6] : memref<128x128xbf16, #tpu.memory_space<vmem>>, vector<128x128xbf16>
      %cst = arith.constant dense<0.000000e+00> : vector<128x128xf32>
      %15 = tpu.matmul %4, %14, %cst {dimension_numbers = #tpu.dot_dimension_numbers<[1], [0], [0], [1], [0, 0, 1, 1], [], []>} : vector<128x128xbf16>, vector<128x128xbf16>, vector<128x128xf32> -> vector<128x128xf32>
      %16 = vector.broadcast %5 : vector<128x1xf32> to vector<128x128xf32>
      %17 = arith.mulf %15, %16 : vector<128x128xf32>
      %18 = arith.truncf %17 : vector<128x128xf32> to vector<128x128xbf16>
      %19 = tpu.concatenate %18, %13 in 1 : vector<128x128xbf16>, vector<128x128xbf16> -> vector<128x256xbf16>
      %c0_7 = arith.constant 0 : index
      %c0_8 = arith.constant 0 : index
      %20 = vector.load %arg7[%c0_7, %c0_8] : memref<256x128xbf16, #tpu.memory_space<vmem>>, vector<256x128xbf16>
      %cst_9 = arith.constant dense<0.000000e+00> : vector<128x128xf32>
      %21 = tpu.matmul %19, %20, %cst_9 {dimension_numbers = #tpu.dot_dimension_numbers<[1], [0], [0], [1], [0, 0, 1, 1], [], []>} : vector<128x256xbf16>, vector<256x128xbf16>, vector<128x128xf32> -> vector<128x128xf32>
      %c0_10 = arith.constant 0 : index
      %c0_11 = arith.constant 0 : index
      %22 = vector.load %arg8[%c0_10, %c0_11] : memref<1x128xf32, #tpu.memory_space<vmem>>, vector<1x128xf32>
      %23 = vector.broadcast %22 : vector<1x128xf32> to vector<128x128xf32>
      %24 = arith.addf %21, %23 : vector<128x128xf32>
      %c0_12 = arith.constant 0 : index
      %c0_13 = arith.constant 0 : index
      %25 = vector.load %arg9[%c0_12, %c0_13] : memref<128x128xf32, #tpu.memory_space<vmem>>, vector<128x128xf32>
      tpu.vector_store %arg9[%c0_12, %c0_13], %24 {strides = array<i32>} : memref<128x128xf32, #tpu.memory_space<vmem>>, vector<128x128xf32>,
    } else {
    }
    return
  }
  func.func @transform_0(%arg0: i32, %arg1: i32) -> (i32, i32) {
    %c0_i32 = arith.constant 0 : i32
    %c0_i32_0 = arith.constant 0 : i32
    %c0_i32_1 = arith.constant 0 : i32
    return %c0_i32, %c0_i32_0 : i32, i32
  }
  func.func @transform_1(%arg0: i32, %arg1: i32) -> (i32, i32) {
    %c0_i32 = arith.constant 0 : i32
    %c0_i32_0 = arith.constant 0 : i32
    return %arg1, %c0_i32 : i32, i32
  }
  func.func @transform_2(%arg0: i32, %arg1: i32) -> (i32, i32) {
    %c0_i32 = arith.constant 0 : i32
    %c0_i32_0 = arith.constant 0 : i32
    %c0_i32_1 = arith.constant 0 : i32
    return %c0_i32, %c0_i32_0 : i32, i32
  }
  func.func @transform_3(%arg0: i32, %arg1: i32) -> (i32, i32) {
    %c0_i32 = arith.constant 0 : i32
    %c0_i32_0 = arith.constant 0 : i32
    %c0_i32_1 = arith.constant 0 : i32
    return %c0_i32, %c0_i32_0 : i32, i32
  }
  func.func @transform_4(%arg0: i32, %arg1: i32) -> (i32, i32) {
    %c0_i32 = arith.constant 0 : i32
    %c0_i32_0 = arith.constant 0 : i32
    %c0_i32_1 = arith.constant 0 : i32
    return %c0_i32, %c0_i32_0 : i32, i32
  }
  func.func @transform_5(%arg0: i32, %arg1: i32) -> (i32, i32) {
    %c0_i32 = arith.constant 0 : i32
    %c0_i32_0 = arith.constant 0 : i32
    %c0_i32_1 = arith.constant 0 : i32
    return %c0_i32, %c0_i32_0 : i32, i32
  }
  func.func @transform_6(%arg0: i32, %arg1: i32) -> (i32, i32) {
    %c0_i32 = arith.constant 0 : i32
    %c0_i32_0 = arith.constant 0 : i32
    %c0_i32_1 = arith.constant 0 : i32
    return %c0_i32, %c0_i32_0 : i32, i32
  }
  func.func @transform_7(%arg0: i32, %arg1: i32) -> (i32, i32) {
    %0 = arith.muli %arg0, %arg1 : i32
    %c0_i32 = arith.constant 0 : i32
    %c0_i32_0 = arith.constant 0 : i32
    return %0, %c0_i32 : i32, i32
  }
}

</mosaic_0001>

<llo_original>
// kernel: graphsage_forward.1
$region0: #{graphsage_forward.1}
  #allocation0 [shape = 'u32[]', space=smem, size = 0x4, offset = 0x4, fixed_abs, tag = 'smem constant byte address 0x4 - core index']
  #allocation1 [shape = 'u32[144,128]{1,0:T(1,128)}', space=vmem, size = 0x12000, scoped, tag = 'internal scratch']
  #allocation2 [shape = 'bf16[128,128]{1,0:T(16,128)(2,1)}', space=vmem, size = 0x8000, scoped, tag = 'scratch operand']
  %s0 = inlined_call_operand.vmem [shape: s8[128,128], index: 0, kind: input, shape index: {}]
  %s1 = inlined_call_operand.vmem [shape: f32[128,1], index: 1, kind: input, shape index: {}]
  %s2 = inlined_call_operand.vmem [shape: bf16[128,128], index: 2, kind: input, shape index: {}]
  %s3 = inlined_call_operand.vmem [shape: bf16[256,128], index: 3, kind: input, shape index: {}]
  %s4 = inlined_call_operand.vmem [shape: f32[1,128], index: 4, kind: input, shape index: {}]
  %s5 = inlined_call_operand.vmem [shape: bf16[256,128], index: 5, kind: input, shape index: {}]
  %s6 = inlined_call_operand.vmem [shape: f32[1,128], index: 6, kind: input, shape index: {}]
  %s7 = inlined_call_operand.vmem [shape: f32[128,128], index: 7, kind: output, shape index: {}]
  %s8 = sld [smem:[#allocation0]]
  $region69: #{graphsage_forward.1} parent=0
    _
  %s10 = ssub.s32 1, %s8
  %s11 = scalar_select 0, %s10, %s8
  loop: start=0, step=1, limit=4
  $region2: #{graphsage_forward.1} parent=0 // loop_pre_header
    _
  $region3: #{graphsage_forward.1} parent=0 // loop_header
    %s13 = sphi 0, %s17
    %p14 = scmp.ge.s32.totalorder %s13, 4
    %s20 = sphi 0, %s32
    %s21 = sphi 0, %s28
    %s22 = sphi 0, %s20
    %s23 = sphi 0, %s21
    %s24 = sphi 0, %s22
    %s25 = sphi 0, %s23
    %s33 = sphi 0, %s33
    %s35 = sphi 0, %s33
    %s36 = sphi 0, %s35
    %s50 = sphi 0, %s36
    %s56 = sphi 0, %s58
    %s59 = sphi 0, %s56
    %s60 = sphi 0, %s59
    %s76 = sphi 0, %s60
    %s80 = sphi 0, %s80
    %s82 = sphi 0, %s80
    %s83 = sphi 0, %s82
    %s97 = sphi 0, %s83
    %s101 = sphi 0, %s101
    %s103 = sphi 0, %s101
    %s104 = sphi 0, %s103
    %s118 = sphi 0, %s104
    %s122 = sphi 0, %s122
    %s124 = sphi 0, %s122
    %s125 = sphi 0, %s124
    %s139 = sphi 0, %s125
    %s143 = sphi 0, %s143
    %s145 = sphi 0, %s143
    %s146 = sphi 0, %s145
    %s160 = sphi 0, %s146
    %s164 = sphi 0, %s164
    %s166 = sphi 0, %s164
    %s167 = sphi 0, %s166
    %s181 = sphi 0, %s167
    %s189 = sphi 0, %s191
    %s192 = sphi 0, %s189
    %s193 = sphi 0, %s192
    %s209 = sphi 0, %s193
  $region4: #{graphsage_forward.1} parent=0 // loop_header_branch
    %16 = sbr.rel (%p14) target = $region8
  $region5: #{graphsage_forward.1} parent=0 // loop_body
    %s18 = ssub.s32 %s13, 1
    %s19 = ssub.s32 %s13, 2
    %s26 = sadd.s32 1, %s21
    %p27 = scmp.ge.s32.totalorder %s26, 1
    %s28 = scalar_select %p27, 0, %s26
    %s29 = sadd.s32 1, %s20
    %s30 = scalar_select %p27, %s29, %s20
    %p31 = scmp.ge.s32.totalorder %s30, 2
    %s32 = scalar_select %p31, 0, %s30
    %s34 = sadd.s32 %s33, 1
    %p37 = scmp.eq.s32.totalorder %s13, 1
    %p38 = scmp.ne.s32.totalorder %s33, %s35
    %p39 = scmp.eq.s32.totalorder %s13, 0
    %p40 = por %p38, %p39
    %p41 = scmp.ne.s32.totalorder %s33, %s35
    %p42 = scmp.eq.s32.totalorder %s18, 1
    %p43 = por %p41, %p42
    %p44 = scmp.ne.s32.totalorder %s35, %s36
    %p45 = scmp.eq.s32.totalorder %s18, 0
    %p46 = por %p44, %p45
    %p47 = scmp.ne.s32.totalorder %s35, %s36
    %p48 = scmp.eq.s32.totalorder %s19, 1
    %p49 = por %p47, %p48
    %p51 = scmp.ne.s32.totalorder %s36, %s50
    %p52 = scmp.eq.s32.totalorder %s19, 0
    %p53 = por %p51, %p52
    %s54 = ssub.s32 %s21, %s28
    %p55 = scmp.eq.s32.totalorder %s54, 0
    %s57 = sadd.s32 %s56, 1
    %s58 = scalar_select %p55, %s56, %s57
    %p61 = pneg %p55
    %p62 = scmp.eq.s32.totalorder %s13, 1
    %p63 = por %p61, %p62
    %p64 = scmp.ne.s32.totalorder %s56, %s59
    %p65 = scmp.eq.s32.totalorder %s13, 0
    %p66 = por %p64, %p65
    %p67 = scmp.ne.s32.totalorder %s56, %s59
    %p68 = scmp.eq.s32.totalorder %s18, 1
    %p69 = por %p67, %p68
    %p70 = scmp.ne.s32.totalorder %s59, %s60
    %p71 = scmp.eq.s32.totalorder %s18, 0
    %p72 = por %p70, %p71
    %p73 = scmp.ne.s32.totalorder %s59, %s60
    %p74 = scmp.eq.s32.totalorder %s19, 1
    %p75 = por %p73, %p74
    %p77 = scmp.ne.s32.totalorder %s60, %s76
    %p78 = scmp.eq.s32.totalorder %s19, 0
    %p79 = por %p77, %p78
    %s81 = sadd.s32 %s80, 1
    %p84 = scmp.eq.s32.totalorder %s13, 1
    %p85 = scmp.ne.s32.totalorder %s80, %s82
    %p86 = scmp.eq.s32.totalorder %s13, 0
    %p87 = por %p85, %p86
    %p88 = scmp.ne.s32.totalorder %s80, %s82
    %p89 = scmp.eq.s32.totalorder %s18, 1
    %p90 = por %p88, %p89
    %p91 = scmp.ne.s32.totalorder %s82, %s83
    %p92 = scmp.eq.s32.totalorder %s18, 0
    %p93 = por %p91, %p92
    %p94 = scmp.ne.s32.totalorder %s82, %s83
    %p95 = scmp.eq.s32.totalorder %s19, 1
    %p96 = por %p94, %p95
    %p98 = scmp.ne.s32.totalorder %s83, %s97
    %p99 = scmp.eq.s32.totalorder %s19, 0
    %p100 = por %p98, %p99
    %s102 = sadd.s32 %s101, 1
    %p105 = scmp.eq.s32.totalorder %s13, 1
    %p106 = scmp.ne.s32.totalorder %s101, %s103
    %p107 = scmp.eq.s32.totalorder %s13, 0
    %p108 = por %p106, %p107
    %p109 = scmp.ne.s32.totalorder %s101, %s103
    %p110 = scmp.eq.s32.totalorder %s18, 1
    %p111 = por %p109, %p110
    %p112 = scmp.ne.s32.totalorder %s103, %s104
    %p113 = scmp.eq.s32.totalorder %s18, 0
    %p114 = por %p112, %p113
    %p115 = scmp.ne.s32.totalorder %s103, %s104
    %p116 = scmp.eq.s32.totalorder %s19, 1
    %p117 = por %p115, %p116
    %p119 = scmp.ne.s32.totalorder %s104, %s118
    %p120 = scmp.eq.s32.totalorder %s19, 0
    %p121 = por %p119, %p120
    %s123 = sadd.s32 %s122, 1
    %p126 = scmp.eq.s32.totalorder %s13, 1
    %p127 = scmp.ne.s32.totalorder %s122, %s124
    %p128 = scmp.eq.s32.totalorder %s13, 0
    %p129 = por %p127, %p128
    %p130 = scmp.ne.s32.totalorder %s122, %s124
    %p131 = scmp.eq.s32.totalorder %s18, 1
    %p132 = por %p130, %p131
    %p133 = scmp.ne.s32.totalorder %s124, %s125
    %p134 = scmp.eq.s32.totalorder %s18, 0
    %p135 = por %p133, %p134
    %p136 = scmp.ne.s32.totalorder %s124, %s125
    %p137 = scmp.eq.s32.totalorder %s19, 1
    %p138 = por %p136, %p137
    %p140 = scmp.ne.s32.totalorder %s125, %s139
    %p141 = scmp.eq.s32.totalorder %s19, 0
    %p142 = por %p140, %p141
    %s144 = sadd.s32 %s143, 1
    %p147 = scmp.eq.s32.totalorder %s13, 1
    %p148 = scmp.ne.s32.totalorder %s143, %s145
    %p149 = scmp.eq.s32.totalorder %s13, 0
    %p150 = por %p148, %p149
    %p151 = scmp.ne.s32.totalorder %s143, %s145
    %p152 = scmp.eq.s32.totalorder %s18, 1
    %p153 = por %p151, %p152
    %p154 = scmp.ne.s32.totalorder %s145, %s146
    %p155 = scmp.eq.s32.totalorder %s18, 0
    %p156 = por %p154, %p155
    %p157 = scmp.ne.s32.totalorder %s145, %s146
    %p158 = scmp.eq.s32.totalorder %s19, 1
    %p159 = por %p157, %p158
    %p161 = scmp.ne.s32.totalorder %s146, %s160
    %p162 = scmp.eq.s32.totalorder %s19, 0
    %p163 = por %p161, %p162
    %s165 = sadd.s32 %s164, 1
    %p168 = scmp.eq.s32.totalorder %s13, 1
    %p169 = scmp.ne.s32.totalorder %s164, %s166
    %p170 = scmp.eq.s32.totalorder %s13, 0
    %p171 = por %p169, %p170
    %p172 = scmp.ne.s32.totalorder %s164, %s166
    %p173 = scmp.eq.s32.totalorder %s18, 1
    %p174 = por %p172, %p173
    %p175 = scmp.ne.s32.totalorder %s166, %s167
    %p176 = scmp.eq.s32.totalorder %s18, 0
    %p177 = por %p175, %p176
    %p178 = scmp.ne.s32.totalorder %s166, %s167
    %p179 = scmp.eq.s32.totalorder %s19, 1
    %p180 = por %p178, %p179
    %p182 = scmp.ne.s32.totalorder %s167, %s181
    %p183 = scmp.eq.s32.totalorder %s19, 0
    %p184 = por %p182, %p183
    %s185 = smul.u32 %s20, %s21
    %s186 = smul.u32 %s32, %s28
    %s187 = ssub.s32 %s185, %s186
    %p188 = scmp.eq.s32.totalorder %s187, 0
    %s190 = sadd.s32 %s189, 1
    %s191 = scalar_select %p188, %s189, %s190
    %p194 = pneg %p188
    %p195 = scmp.eq.s32.totalorder %s13, 1
    %p196 = por %p194, %p195
    %p197 = scmp.ne.s32.totalorder %s189, %s192
    %p198 = scmp.eq.s32.totalorder %s13, 0
    %p199 = por %p197, %p198
    %p200 = scmp.ne.s32.totalorder %s189, %s192
    %p201 = scmp.eq.s32.totalorder %s18, 1
    %p202 = por %p200, %p201
    %p203 = scmp.ne.s32.totalorder %s192, %s193
    %p204 = scmp.eq.s32.totalorder %s18, 0
    %p205 = por %p203, %p204
    %p206 = scmp.ne.s32.totalorder %s192, %s193
    %p207 = scmp.eq.s32.totalorder %s19, 1
    %p208 = por %p206, %p207
    %p210 = scmp.ne.s32.totalorder %s193, %s209
    %p211 = scmp.eq.s32.totalorder %s19, 0
    %p212 = por %p210, %p211
    %p213 = scmp.le.s32.totalorder 1, %s13
    %p214 = scmp.lt.s32.totalorder %s13, 3
    %p215 = pnand %p213, %p214
    %p216 = pneg %p215
    // Predicated region
    $region9: #{graphsage_forward.1} parent=5 // pred_check
      _
    $region10: #{graphsage_forward.1} parent=5 // pred_check_branch
      %218 = sbr.rel (%p215) target = $region12
    $region11: #{graphsage_forward.1} parent=5 // pred_region
      %s219 = ssub.s32 %s13, 1
      // Predicated region
      $region13: #{graphsage_forward.1} parent=11 // pred_check
        %p220 = pneg %p46
      $region14: #{graphsage_forward.1} parent=11 // pred_check_branch
        %222 = sbr.rel (%p220) target = $region16
      $region15: #{graphsage_forward.1} parent=11 // pred_region
        _
      $region16: #{graphsage_forward.1} parent=11 // pred_fallthru
        _
      // Predicated region
      $region17: #{graphsage_forward.1} parent=11 // pred_check
        %p223 = pneg %p72
      $region18: #{graphsage_forward.1} parent=11 // pred_check_branch
        %225 = sbr.rel (%p223) target = $region20
      $region19: #{graphsage_forward.1} parent=11 // pred_region
        %s226 = smul.u32 16, %s23
        %p227 = scmp.lt.s32.totalorder %s226, 15
        %s228 = scalar_select %p227, %s226, 15
        %s229 = smul.addr %s228, 8
        %s230 = scalar_lea.vmem %s1, %s229
        %s231 = smul.u32 16, %s23
      $region20: #{graphsage_forward.1} parent=11 // pred_fallthru
        _
      // Predicated region
      $region21: #{graphsage_forward.1} parent=11 // pred_check
        %p232 = pneg %p93
      $region22: #{graphsage_forward.1} parent=11 // pred_check_branch
        %234 = sbr.rel (%p232) target = $region24
      $region23: #{graphsage_forward.1} parent=11 // pred_region
        _
      $region24: #{graphsage_forward.1} parent=11 // pred_fallthru
        _
      // Predicated region
      $region25: #{graphsage_forward.1} parent=11 // pred_check
        %p235 = pneg %p114
      $region26: #{graphsage_forward.1} parent=11 // pred_check_branch
        %237 = sbr.rel (%p235) target = $region28
      $region27: #{graphsage_forward.1} parent=11 // pred_region
        _
      $region28: #{graphsage_forward.1} parent=11 // pred_fallthru
        _
      // Predicated region
      $region29: #{graphsage_forward.1} parent=11 // pred_check
        %p238 = pneg %p135
      $region30: #{graphsage_forward.1} parent=11 // pred_check_branch
        %240 = sbr.rel (%p238) target = $region32
      $region31: #{graphsage_forward.1} parent=11 // pred_region
        _
      $region32: #{graphsage_forward.1} parent=11 // pred_fallthru
        _
      // Predicated region
      $region33: #{graphsage_forward.1} parent=11 // pred_check
        %p241 = pneg %p156
      $region34: #{graphsage_forward.1} parent=11 // pred_check_branch
        %243 = sbr.rel (%p241) target = $region36
      $region35: #{graphsage_forward.1} parent=11 // pred_region
        _
      $region36: #{graphsage_forward.1} parent=11 // pred_fallthru
        _
      // Predicated region
      $region37: #{graphsage_forward.1} parent=11 // pred_check
        %p244 = pneg %p177
      $region38: #{graphsage_forward.1} parent=11 // pred_check_branch
        %246 = sbr.rel (%p244) target = $region40
      $region39: #{graphsage_forward.1} parent=11 // pred_region
        _
      $region40: #{graphsage_forward.1} parent=11 // pred_fallthru
        _
    $region12: #{graphsage_forward.1} parent=5 // pred_fallthru
      _
    %p247 = scmp.lt.s32.totalorder %s13, 2
    // Predicated region
    $region41: #{graphsage_forward.1} parent=5 // pred_check
      %p248 = pneg %p247
    $region42: #{graphsage_forward.1} parent=5 // pred_check_branch
      %250 = sbr.rel (%p248) target = $region44
    $region43: #{graphsage_forward.1} parent=5 // pred_region
      _
    $region44: #{graphsage_forward.1} parent=5 // pred_fallthru
      _
    %p251 = scmp.le.s32.totalorder 1, %s13
    %p252 = scmp.lt.s32.totalorder %s13, 3
    %p253 = pnand %p251, %p252
    %p254 = pneg %p253
    // Predicated region
    $region45: #{graphsage_forward.1} parent=5 // pred_check
      _
    $region46: #{graphsage_forward.1} parent=5 // pred_check_branch
      %256 = sbr.rel (%p253) target = $region48
    $region47: #{graphsage_forward.1} parent=5 // pred_region
      %s257 = ssub.s32 %s13, 1
      %p258 = pneg %p46
      %p259 = pneg %p43
      %s260 = smul.u32 16, %s23
      %p261 = scmp.lt.s32.totalorder %s260, 15
      %s262 = scalar_select %p261, %s260, 15
      %s263 = smul.addr %s262, 8
      %s264 = scalar_lea.vmem %s1, %s263
      %p265 = pneg %p72
      %p266 = pneg %p69
      %p267 = pneg %p93
      %p268 = pneg %p90
      %p269 = pneg %p114
      %p270 = pneg %p111
      %p271 = pneg %p135
      %p272 = pneg %p132
      %p273 = pneg %p156
      %p274 = pneg %p153
      %p275 = pneg %p177
      %p276 = pneg %p174
      %p277 = pneg %p205
      %p278 = pneg %p202
      %s279 = smul.u32 %s22, %s23
      %s280 = smul.u32 16, %s279
      %p281 = scmp.lt.s32.totalorder %s280, 15
      %s282 = scalar_select %p281, %s280, 15
      %s283 = smul.addr %s282, 8
      %s284 = scalar_lea.vmem %s7, %s283
      %s285 = smul.u32 16, %s23
      %p286 = scmp.lt.s32.totalorder %s285, 15
      %s287 = scalar_select %p286, %s285, 15
      %s288 = smul.addr %s287, 8
      %s289 = scalar_lea.vmem %s1, %s288
      %s290 = smul.u32 16, %s23
      %s291 = smul.u32 %s22, %s23
      %s292 = smul.u32 16, %s291
      %p293 = scmp.lt.s32.totalorder %s292, 15
      %s294 = scalar_select %p293, %s292, 15
      %s295 = smul.addr %s294, 8
      %s296 = scalar_lea.vmem %s7, %s295
      %s297 = smul.u32 %s22, %s23
      %s298 = smul.u32 16, %s297
      %s300 = smul.u32 %s23, 128
      %s301 = sshra.s32 %s300, 5
      %s302 = sand.u32 %s300, 31
      %s303 = smul.addr %s301, 8
      %s304 = scalar_lea.vmem %s0, %s303
      %v305 = vld [vmem:[%s304] sm:$0xff]
      %v306 = vld [vmem:[%s304 + $0x8] sm:$0xff]
      %v307 = vld [vmem:[%s304 + $0x10] sm:$0xff]
      %v308 = vld [vmem:[%s304 + $0x18] sm:$0xff]
      %v309 = vunpack.c.l.s8.bf16 %v305
      %v310 = vunpack.c.h.s8.bf16 %v305
      %v311 = vunpack.c.l.s8.bf16 %v306
      %v312 = vunpack.c.h.s8.bf16 %v306
      %v313 = vunpack.c.l.s8.bf16 %v307
      %v314 = vunpack.c.h.s8.bf16 %v307
      %v315 = vunpack.c.l.s8.bf16 %v308
      %v316 = vunpack.c.h.s8.bf16 %v308
      %v317 = vld [vmem:[%s289] sm:$0xff]
      %v318 = vld [vmem:[%s289 + $0x8] sm:$0xff]
      %v319 = vld [vmem:[%s289 + $0x10] sm:$0xff]
      %v320 = vld [vmem:[%s289 + $0x18] sm:$0xff]
      %v321 = vld [vmem:[%s289 + $0x20] sm:$0xff]
      %v322 = vld [vmem:[%s289 + $0x28] sm:$0xff]
      %v323 = vld [vmem:[%s289 + $0x30] sm:$0xff]
      %v324 = vld [vmem:[%s289 + $0x38] sm:$0xff]
      %v325 = vld [vmem:[%s289 + $0x40] sm:$0xff]
      %v326 = vld [vmem:[%s289 + $0x48] sm:$0xff]
      %v327 = vld [vmem:[%s289 + $0x50] sm:$0xff]
      %v328 = vld [vmem:[%s289 + $0x58] sm:$0xff]
      %v329 = vld [vmem:[%s289 + $0x60] sm:$0xff]
      %v330 = vld [vmem:[%s289 + $0x68] sm:$0xff]
      %v331 = vld [vmem:[%s289 + $0x70] sm:$0xff]
      %v332 = vld [vmem:[%s289 + $0x78] sm:$0xff]
      %p333 = scmp.eq.s32.totalorder %s22, 0
      // Predicated region
      $region49: #{graphsage_forward.1} parent=47 // pred_check
        %p334 = pneg %p333
      $region50: #{graphsage_forward.1} parent=47 // pred_check_branch
        %336 = sbr.rel (%p334) target = $region52
      $region51: #{graphsage_forward.1} parent=47 // pred_region
        %s337 = sshra.s32 %s300, 3
        %s338 = sand.u32 %s300, 7
        %s339 = smul.addr %s337, 4
        %s340 = scalar_lea.vmem %s2, %s339
        %v341 = vld [vmem:[%s340] sm:$0xf]
        %v342 = vld [vmem:[%s340 + $0x4] sm:$0xf]
        %v343 = vld [vmem:[%s340 + $0x8] sm:$0xf]
        %v344 = vld [vmem:[%s340 + $0xc] sm:$0xf]
        %v345 = vld [vmem:[%s340 + $0x10] sm:$0xf]
        %v346 = vld [vmem:[%s340 + $0x14] sm:$0xf]
        %v347 = vld [vmem:[%s340 + $0x18] sm:$0xf]
        %v348 = vld [vmem:[%s340 + $0x1c] sm:$0xf]
        %v349 = vld [vmem:[%s340 + $0x20] sm:$0xf]
        %v350 = vld [vmem:[%s340 + $0x24] sm:$0xf]
        %v351 = vld [vmem:[%s340 + $0x28] sm:$0xf]
        %v352 = vld [vmem:[%s340 + $0x2c] sm:$0xf]
        %v353 = vld [vmem:[%s340 + $0x30] sm:$0xf]
        %v354 = vld [vmem:[%s340 + $0x34] sm:$0xf]
        %v355 = vld [vmem:[%s340 + $0x38] sm:$0xf]
        %v356 = vld [vmem:[%s340 + $0x3c] sm:$0xf]
        %v357 = vld [vmem:[%s2] sm:$0xf]
        %v358 = vld [vmem:[%s2 + $0x4] sm:$0xf]
        %v359 = vld [vmem:[%s2 + $0x8] sm:$0xf]
        %v360 = vld [vmem:[%s2 + $0xc] sm:$0xf]
        %v361 = vld [vmem:[%s2 + $0x10] sm:$0xf]
        %v362 = vld [vmem:[%s2 + $0x14] sm:$0xf]
        %v363 = vld [vmem:[%s2 + $0x18] sm:$0xf]
        %v364 = vld [vmem:[%s2 + $0x1c] sm:$0xf]
        %v365 = vld [vmem:[%s2 + $0x20] sm:$0xf]
        %v366 = vld [vmem:[%s2 + $0x24] sm:$0xf]
        %v367 = vld [vmem:[%s2 + $0x28] sm:$0xf]
        %v368 = vld [vmem:[%s2 + $0x2c] sm:$0xf]
        %v369 = vld [vmem:[%s2 + $0x30] sm:$0xf]
        %v370 = vld [vmem:[%s2 + $0x34] sm:$0xf]
        %v371 = vld [vmem:[%s2 + $0x38] sm:$0xf]
        %v372 = vld [vmem:[%s2 + $0x3c] sm:$0xf]
        %v389 = vunpack.c.l.b16 %v357
        %v390 = vunpack.c.l.b16 %v358
        %v391 = vunpack.c.l.b16 %v359
        %v392 = vunpack.c.l.b16 %v360
        %v393 = vunpack.c.l.b16 %v361
        %v394 = vunpack.c.l.b16 %v362
        %v395 = vunpack.c.l.b16 %v363
        %v396 = vunpack.c.l.b16 %v364
        %v397 = vunpack.c.l.b16 %v365
        %v398 = vunpack.c.l.b16 %v366
        %v399 = vunpack.c.l.b16 %v367
        %v400 = vunpack.c.l.b16 %v368
        %v401 = vunpack.c.l.b16 %v369
        %v402 = vunpack.c.l.b16 %v370
        %v403 = vunpack.c.l.b16 %v371
        %v404 = vunpack.c.l.b16 %v372
        %v405 = vpack.c.b16 %v390, %v389
        %v406 = vpack.c.b16 %v392, %v391
        %v407 = vpack.c.b16 %v394, %v393
        %v408 = vpack.c.b16 %v396, %v395
        %v409 = vpack.c.b16 %v398, %v397
        %v410 = vpack.c.b16 %v400, %v399
        %v411 = vpack.c.b16 %v402, %v401
        %v412 = vpack.c.b16 %v404, %v403
        %421 = vmatprep.subr.bf16.mxu0 0
        %422 = vmatpush1.bf16.msra.mxu0 %v405
        %423 = vmatprep.subr.bf16.mxu0 0
        %424 = vmatpush1.bf16.msra.mxu0 %v406
        %425 = vmatprep.subr.bf16.mxu0 0
        %426 = vmatpush1.bf16.msra.mxu0 %v407
        %427 = vmatprep.subr.bf16.mxu0 0
        %428 = vmatpush1.bf16.msra.mxu0 %v408
        %429 = vmatprep.subr.bf16.mxu0 0
        %430 = vmatpush1.bf16.msra.mxu0 %v409
        %431 = vmatprep.subr.bf16.mxu0 0
        %432 = vmatpush1.bf16.msra.mxu0 %v410
        %433 = vmatprep.subr.bf16.mxu0 0
        %434 = vmatpush1.bf16.msra.mxu0 %v411
        %435 = vmatprep.subr.bf16.mxu0 0
        %436 = vmatpush1.bf16.msra.mxu0 %v412
        %437 = vmatprep.subr.bf16.mxu0 0
        %438 = vmatpush1.bf16.msra.mxu0 0
        %439 = vmatprep.subr.bf16.mxu0 0
        %440 = vmatpush1.bf16.msra.mxu0 0
        %441 = vmatprep.subr.bf16.mxu0 0
        %442 = vmatpush1.bf16.msra.mxu0 0
        %443 = vmatprep.subr.bf16.mxu0 0
        %444 = vmatpush1.bf16.msra.mxu0 0
        %445 = vmatprep.subr.bf16.mxu0 0
        %446 = vmatpush1.bf16.msra.mxu0 0
        %447 = vmatprep.subr.bf16.mxu0 0
        %448 = vmatpush1.bf16.msra.mxu0 0
        %449 = vmatprep.subr.bf16.mxu0 0
        %450 = vmatpush1.bf16.msra.mxu0 0
        %451 = vmatprep.subr.bf16.mxu0 0
        %452 = vmatpush1.bf16.msra.mxu0 0
        %453 = vmatprep.mubr.bf16.mxu0 0
        %454 = vmatmul.mubr.bf16.gmra.mrb[0].mxu0 %v309
        %v455 = vpop.f32.mrb[0].mxu0
        %v456 = vadd.f32 0.0, %v455
        %v457 = vpop.f32.mrb[0].mxu0
        %v458 = vpop.f32.mrb[0].mxu0
        %v459 = vadd.f32 0.0, %v458
        %v460 = vpop.f32.mrb[0].mxu0
        %461 = vmatprep.mubr.bf16.mxu0 0
        %462 = vmatmul.mubr.bf16.gmra.mrb[0].mxu0 %v310
        %v463 = vpop.f32.mrb[0].mxu0
        %v464 = vadd.f32 0.0, %v463
        %v465 = vpop.f32.mrb[0].mxu0
        %v466 = vpop.f32.mrb[0].mxu0
        %v467 = vadd.f32 0.0, %v466
        %v468 = vpop.f32.mrb[0].mxu0
        %469 = vmatprep.mubr.bf16.mxu0 0
        %470 = vmatmul.mubr.bf16.gmra.mrb[0].mxu0 %v311
        %v471 = vpop.f32.mrb[0].mxu0
        %v472 = vadd.f32 0.0, %v471
        %v473 = vpop.f32.mrb[0].mxu0
        %v474 = vpop.f32.mrb[0].mxu0
        %v475 = vadd.f32 0.0, %v474
        %v476 = vpop.f32.mrb[0].mxu0
        %477 = vmatprep.mubr.bf16.mxu0 0
        %478 = vmatmul.mubr.bf16.gmra.mrb[0].mxu0 %v312
        %v479 = vpop.f32.mrb[0].mxu0
        %v480 = vadd.f32 0.0, %v479
        %v481 = vpop.f32.mrb[0].mxu0
        %v482 = vpop.f32.mrb[0].mxu0
        %v483 = vadd.f32 0.0, %v482
        %v484 = vpop.f32.mrb[0].mxu0
        %485 = vmatprep.mubr.bf16.mxu0 0
        %486 = vmatmul.mubr.bf16.gmra.mrb[0].mxu0 %v313
        %v487 = vpop.f32.mrb[0].mxu0
        %v488 = vadd.f32 0.0, %v487
        %v489 = vpop.f32.mrb[0].mxu0
        %v490 = vpop.f32.mrb[0].mxu0
        %v491 = vadd.f32 0.0, %v490
        %v492 = vpop.f32.mrb[0].mxu0
        %493 = vmatprep.mubr.bf16.mxu0 0
        %494 = vmatmul.mubr.bf16.gmra.mrb[0].mxu0 %v314
        %v495 = vpop.f32.mrb[0].mxu0
        %v496 = vadd.f32 0.0, %v495
        %v497 = vpop.f32.mrb[0].mxu0
        %v498 = vpop.f32.mrb[0].mxu0
        %v499 = vadd.f32 0.0, %v498
        %v500 = vpop.f32.mrb[0].mxu0
        %501 = vmatprep.mubr.bf16.mxu0 0
        %502 = vmatmul.mubr.bf16.gmra.mrb[0].mxu0 %v315
        %v503 = vpop.f32.mrb[0].mxu0
        %v504 = vadd.f32 0.0, %v503
        %v505 = vpop.f32.mrb[0].mxu0
        %v506 = vpop.f32.mrb[0].mxu0
        %v507 = vadd.f32 0.0, %v506
        %v508 = vpop.f32.mrb[0].mxu0
        %509 = vmatprep.mubr.bf16.mxu0 0
        %510 = vmatmul.mubr.bf16.gmra.mrb[0].mxu0 %v316
        %v511 = vpop.f32.mrb[0].mxu0
        %v512 = vadd.f32 0.0, %v511
        %v513 = vpop.f32.mrb[0].mxu0
        %v514 = vpop.f32.mrb[0].mxu0
        %v515 = vadd.f32 0.0, %v514
        %v516 = vpop.f32.mrb[0].mxu0
        %517 = vdwg.mxu0
        %519 = vset.pattern.permute.xlu0 0
        %520 = vperm.xlu0 %519, %v317
        %v521 = vpop.permute.xlu0 %520
        %524 = vset.pattern.permute.xlu0 0
        %525 = vperm.xlu0 %524, %v318
        %v526 = vpop.permute.xlu0 %525
        %529 = vset.pattern.permute.xlu0 0
        %530 = vperm.xlu0 %529, %v319
        %v531 = vpop.permute.xlu0 %530
        %534 = vset.pattern.permute.xlu0 0
        %535 = vperm.xlu0 %534, %v320
        %v536 = vpop.permute.xlu0 %535
        %539 = vset.pattern.permute.xlu0 0
        %540 = vperm.xlu0 %539, %v321
        %v541 = vpop.permute.xlu0 %540
        %544 = vset.pattern.permute.xlu0 0
        %545 = vperm.xlu0 %544, %v322
        %v546 = vpop.permute.xlu0 %545
        %549 = vset.pattern.permute.xlu0 0
        %550 = vperm.xlu0 %549, %v323
        %v551 = vpop.permute.xlu0 %550
        %554 = vset.pattern.permute.xlu0 0
        %555 = vperm.xlu0 %554, %v324
        %v556 = vpop.permute.xlu0 %555
        %559 = vset.pattern.permute.xlu0 0
        %560 = vperm.xlu0 %559, %v325
        %v561 = vpop.permute.xlu0 %560
        %564 = vset.pattern.permute.xlu0 0
        %565 = vperm.xlu0 %564, %v326
        %v566 = vpop.permute.xlu0 %565
        %569 = vset.pattern.permute.xlu0 0
        %570 = vperm.xlu0 %569, %v327
        %v571 = vpop.permute.xlu0 %570
        %574 = vset.pattern.permute.xlu0 0
        %575 = vperm.xlu0 %574, %v328
        %v576 = vpop.permute.xlu0 %575
        %579 = vset.pattern.permute.xlu0 0
        %580 = vperm.xlu0 %579, %v329
        %v581 = vpop.permute.xlu0 %580
        %584 = vset.pattern.permute.xlu0 0
        %585 = vperm.xlu0 %584, %v330
        %v586 = vpop.permute.xlu0 %585
        %589 = vset.pattern.permute.xlu0 0
        %590 = vperm.xlu0 %589, %v331
        %v591 = vpop.permute.xlu0 %590
        %594 = vset.pattern.permute.xlu0 0
        %595 = vperm.xlu0 %594, %v332
        %v596 = vpop.permute.xlu0 %595
        %v598 = vmul.f32 %v456, %v521
        %v599 = vmul.f32 %v459, %v526
        %v600 = vmul.f32 %v464, %v531
        %v601 = vmul.f32 %v467, %v536
        %v602 = vmul.f32 %v472, %v541
        %v603 = vmul.f32 %v475, %v546
        %v604 = vmul.f32 %v480, %v551
        %v605 = vmul.f32 %v483, %v556
        %v606 = vmul.f32 %v488, %v561
        %v607 = vmul.f32 %v491, %v566
        %v608 = vmul.f32 %v496, %v571
        %v609 = vmul.f32 %v499, %v576
        %v610 = vmul.f32 %v504, %v581
        %v611 = vmul.f32 %v507, %v586
        %v612 = vmul.f32 %v512, %v591
        %v613 = vmul.f32 %v515, %v596
        %v614 = vpack.c.bf16 %v599, %v598
        %v615 = vpack.c.bf16 %v601, %v600
        %v616 = vpack.c.bf16 %v603, %v602
        %v617 = vpack.c.bf16 %v605, %v604
        %v618 = vpack.c.bf16 %v607, %v606
        %v619 = vpack.c.bf16 %v609, %v608
        %v620 = vpack.c.bf16 %v611, %v610
        %v621 = vpack.c.bf16 %v613, %v612
        %v638 = vunpack.c.l.b16 %v341
        %v639 = vunpack.c.l.b16 %v342
        %v640 = vunpack.c.l.b16 %v343
        %v641 = vunpack.c.l.b16 %v344
        %v642 = vunpack.c.l.b16 %v345
        %v643 = vunpack.c.l.b16 %v346
        %v644 = vunpack.c.l.b16 %v347
        %v645 = vunpack.c.l.b16 %v348
        %v646 = vunpack.c.l.b16 %v349
        %v647 = vunpack.c.l.b16 %v350
        %v648 = vunpack.c.l.b16 %v351
        %v649 = vunpack.c.l.b16 %v352
        %v650 = vunpack.c.l.b16 %v353
        %v651 = vunpack.c.l.b16 %v354
        %v652 = vunpack.c.l.b16 %v355
        %v653 = vunpack.c.l.b16 %v356
        %v654 = vpack.c.b16 %v639, %v638
        %v655 = vpack.c.b16 %v641, %v640
        %v656 = vpack.c.b16 %v643, %v642
        %v657 = vpack.c.b16 %v645, %v644
        %v658 = vpack.c.b16 %v647, %v646
        %v659 = vpack.c.b16 %v649, %v648
        %v660 = vpack.c.b16 %v651, %v650
        %v661 = vpack.c.b16 %v653, %v652
        %v670 = vld [vmem:[%s3] sm:$0xf]
        %v671 = vld [vmem:[%s3 + $0x4] sm:$0xf]
        %v672 = vld [vmem:[%s3 + $0x8] sm:$0xf]
        %v673 = vld [vmem:[%s3 + $0xc] sm:$0xf]
        %v674 = vld [vmem:[%s3 + $0x10] sm:$0xf]
        %v675 = vld [vmem:[%s3 + $0x14] sm:$0xf]
        %v676 = vld [vmem:[%s3 + $0x18] sm:$0xf]
        %v677 = vld [vmem:[%s3 + $0x1c] sm:$0xf]
        %v678 = vld [vmem:[%s3 + $0x20] sm:$0xf]
        %v679 = vld [vmem:[%s3 + $0x24] sm:$0xf]
        %v680 = vld [vmem:[%s3 + $0x28] sm:$0xf]
        %v681 = vld [vmem:[%s3 + $0x2c] sm:$0xf]
        %v682 = vld [vmem:[%s3 + $0x30] sm:$0xf]
        %v683 = vld [vmem:[%s3 + $0x34] sm:$0xf]
        %v684 = vld [vmem:[%s3 + $0x38] sm:$0xf]
        %v685 = vld [vmem:[%s3 + $0x3c] sm:$0xf]
        %v686 = vld [vmem:[%s3 + $0x40] sm:$0xf]
        %v687 = vld [vmem:[%s3 + $0x44] sm:$0xf]
        %v688 = vld [vmem:[%s3 + $0x48] sm:$0xf]
        %v689 = vld [vmem:[%s3 + $0x4c] sm:$0xf]
        %v690 = vld [vmem:[%s3 + $0x50] sm:$0xf]
        %v691 = vld [vmem:[%s3 + $0x54] sm:$0xf]
        %v692 = vld [vmem:[%s3 + $0x58] sm:$0xf]
        %v693 = vld [vmem:[%s3 + $0x5c] sm:$0xf]
        %v694 = vld [vmem:[%s3 + $0x60] sm:$0xf]
        %v695 = vld [vmem:[%s3 + $0x64] sm:$0xf]
        %v696 = vld [vmem:[%s3 + $0x68] sm:$0xf]
        %v697 = vld [vmem:[%s3 + $0x6c] sm:$0xf]
        %v698 = vld [vmem:[%s3 + $0x70] sm:$0xf]
        %v699 = vld [vmem:[%s3 + $0x74] sm:$0xf]
        %v700 = vld [vmem:[%s3 + $0x78] sm:$0xf]
        %v701 = vld [vmem:[%s3 + $0x7c] sm:$0xf]
        %v702 = vld [vmem:[%s4] sm:$0x1]
        %v704 = vlaneseq
        %v705 = vshrl.u32 %v704, 7
        %v706 = vsub.s32 0, %v705
        %v707 = vrot.slane %v702, %v706
        %v741 = vunpack.c.l.b16 %v670
        %v742 = vunpack.c.l.b16 %v671
        %v743 = vunpack.c.l.b16 %v672
        %v744 = vunpack.c.l.b16 %v673
        %v745 = vunpack.c.l.b16 %v674
        %v746 = vunpack.c.l.b16 %v675
        %v747 = vunpack.c.l.b16 %v676
        %v748 = vunpack.c.l.b16 %v677
        %v749 = vunpack.c.l.b16 %v678
        %v750 = vunpack.c.l.b16 %v679
        %v751 = vunpack.c.l.b16 %v680
        %v752 = vunpack.c.l.b16 %v681
        %v753 = vunpack.c.l.b16 %v682
        %v754 = vunpack.c.l.b16 %v683
        %v755 = vunpack.c.l.b16 %v684
        %v756 = vunpack.c.l.b16 %v685
        %v757 = vunpack.c.l.b16 %v686
        %v758 = vunpack.c.l.b16 %v687
        %v759 = vunpack.c.l.b16 %v688
        %v760 = vunpack.c.l.b16 %v689
        %v761 = vunpack.c.l.b16 %v690
        %v762 = vunpack.c.l.b16 %v691
        %v763 = vunpack.c.l.b16 %v692
        %v764 = vunpack.c.l.b16 %v693
        %v765 = vunpack.c.l.b16 %v694
        %v766 = vunpack.c.l.b16 %v695
        %v767 = vunpack.c.l.b16 %v696
        %v768 = vunpack.c.l.b16 %v697
        %v769 = vunpack.c.l.b16 %v698
        %v770 = vunpack.c.l.b16 %v699
        %v771 = vunpack.c.l.b16 %v700
        %v772 = vunpack.c.l.b16 %v701
        %v773 = vpack.c.b16 %v742, %v741
        %v774 = vpack.c.b16 %v744, %v743
        %v775 = vpack.c.b16 %v746, %v745
        %v776 = vpack.c.b16 %v748, %v747
        %v777 = vpack.c.b16 %v750, %v749
        %v778 = vpack.c.b16 %v752, %v751
        %v779 = vpack.c.b16 %v754, %v753
        %v780 = vpack.c.b16 %v756, %v755
        %v781 = vpack.c.b16 %v758, %v757
        %v782 = vpack.c.b16 %v760, %v759
        %v783 = vpack.c.b16 %v762, %v761
        %v784 = vpack.c.b16 %v764, %v763
        %v785 = vpack.c.b16 %v766, %v765
        %v786 = vpack.c.b16 %v768, %v767
        %v787 = vpack.c.b16 %v770, %v769
        %v788 = vpack.c.b16 %v772, %v771
        %805 = vmatprep.subr.bf16.mxu0 0
        %806 = vmatpush1.bf16.msra.mxu0 %v773
        %807 = vmatprep.subr.bf16.mxu0 0
        %808 = vmatpush1.bf16.msra.mxu0 %v774
        %809 = vmatprep.subr.bf16.mxu0 0
        %810 = vmatpush1.bf16.msra.mxu0 %v775
        %811 = vmatprep.subr.bf16.mxu0 0
        %812 = vmatpush1.bf16.msra.mxu0 %v776
        %813 = vmatprep.subr.bf16.mxu0 0
        %814 = vmatpush1.bf16.msra.mxu0 %v777
        %815 = vmatprep.subr.bf16.mxu0 0
        %816 = vmatpush1.bf16.msra.mxu0 %v778
        %817 = vmatprep.subr.bf16.mxu0 0
        %818 = vmatpush1.bf16.msra.mxu0 %v779
        %819 = vmatprep.subr.bf16.mxu0 0
        %820 = vmatpush1.bf16.msra.mxu0 %v780
        %821 = vmatprep.subr.bf16.mxu0 0
        %822 = vmatpush1.bf16.msra.mxu0 %v781
        %823 = vmatprep.subr.bf16.mxu0 0
        %824 = vmatpush1.bf16.msra.mxu0 %v782
        %825 = vmatprep.subr.bf16.mxu0 0
        %826 = vmatpush1.bf16.msra.mxu0 %v783
        %827 = vmatprep.subr.bf16.mxu0 0
        %828 = vmatpush1.bf16.msra.mxu0 %v784
        %829 = vmatprep.subr.bf16.mxu0 0
        %830 = vmatpush1.bf16.msra.mxu0 %v785
        %831 = vmatprep.subr.bf16.mxu0 0
        %832 = vmatpush1.bf16.msra.mxu0 %v786
        %833 = vmatprep.subr.bf16.mxu0 0
        %834 = vmatpush1.bf16.msra.mxu0 %v787
        %835 = vmatprep.subr.bf16.mxu0 0
        %836 = vmatpush1.bf16.msra.mxu0 %v788
        %837 = vmatprep.mubr.bf16.mxu0 %v654
        %838 = vmatmul.mubr.bf16.gmra.mrb[0].mxu0 %v614
        %v839 = vpop.f32.mrb[0].mxu0
        %v840 = vadd.f32 %v707, %v839
        %v841 = vpop.f32.mrb[0].mxu0
        %v842 = vpop.f32.mrb[0].mxu0
        %v843 = vadd.f32 %v707, %v842
        %v844 = vpop.f32.mrb[0].mxu0
        %845 = vmatprep.mubr.bf16.mxu0 %v655
        %846 = vmatmul.mubr.bf16.gmra.mrb[0].mxu0 %v615
        %v847 = vpop.f32.mrb[0].mxu0
        %v848 = vadd.f32 %v707, %v847
        %v849 = vpop.f32.mrb[0].mxu0
        %v850 = vpop.f32.mrb[0].mxu0
        %v851 = vadd.f32 %v707, %v850
        %v852 = vpop.f32.mrb[0].mxu0
        %853 = vmatprep.mubr.bf16.mxu0 %v656
        %854 = vmatmul.mubr.bf16.gmra.mrb[0].mxu0 %v616
        %v855 = vpop.f32.mrb[0].mxu0
        %v856 = vadd.f32 %v707, %v855
        %v857 = vpop.f32.mrb[0].mxu0
        %v858 = vpop.f32.mrb[0].mxu0
        %v859 = vadd.f32 %v707, %v858
        %v860 = vpop.f32.mrb[0].mxu0
        %861 = vmatprep.mubr.bf16.mxu0 %v657
        %862 = vmatmul.mubr.bf16.gmra.mrb[0].mxu0 %v617
        %v863 = vpop.f32.mrb[0].mxu0
        %v864 = vadd.f32 %v707, %v863
        %v865 = vpop.f32.mrb[0].mxu0
        %v866 = vpop.f32.mrb[0].mxu0
        %v867 = vadd.f32 %v707, %v866
        %v868 = vpop.f32.mrb[0].mxu0
        %869 = vmatprep.mubr.bf16.mxu0 %v658
        %870 = vmatmul.mubr.bf16.gmra.mrb[0].mxu0 %v618
        %v871 = vpop.f32.mrb[0].mxu0
        %v872 = vadd.f32 %v707, %v871
        %v873 = vpop.f32.mrb[0].mxu0
        %v874 = vpop.f32.mrb[0].mxu0
        %v875 = vadd.f32 %v707, %v874
        %v876 = vpop.f32.mrb[0].mxu0
        %877 = vmatprep.mubr.bf16.mxu0 %v659
        %878 = vmatmul.mubr.bf16.gmra.mrb[0].mxu0 %v619
        %v879 = vpop.f32.mrb[0].mxu0
        %v880 = vadd.f32 %v707, %v879
        %v881 = vpop.f32.mrb[0].mxu0
        %v882 = vpop.f32.mrb[0].mxu0
        %v883 = vadd.f32 %v707, %v882
        %v884 = vpop.f32.mrb[0].mxu0
        %885 = vmatprep.mubr.bf16.mxu0 %v660
        %886 = vmatmul.mubr.bf16.gmra.mrb[0].mxu0 %v620
        %v887 = vpop.f32.mrb[0].mxu0
        %v888 = vadd.f32 %v707, %v887
        %v889 = vpop.f32.mrb[0].mxu0
        %v890 = vpop.f32.mrb[0].mxu0
        %v891 = vadd.f32 %v707, %v890
        %v892 = vpop.f32.mrb[0].mxu0
        %893 = vmatprep.mubr.bf16.mxu0 %v661
        %894 = vmatmul.mubr.bf16.gmra.mrb[0].mxu0 %v621
        %v895 = vpop.f32.mrb[0].mxu0
        %v896 = vadd.f32 %v707, %v895
        %v897 = vpop.f32.mrb[0].mxu0
        %v898 = vpop.f32.mrb[0].mxu0
        %v899 = vadd.f32 %v707, %v898
        %v900 = vpop.f32.mrb[0].mxu0
        %901 = vdwg.mxu0
        %v902 = vmax.f32 %v840, 0.0
        %v903 = vmax.f32 %v843, 0.0
        %v904 = vmax.f32 %v848, 0.0
        %v905 = vmax.f32 %v851, 0.0
        %v906 = vmax.f32 %v856, 0.0
        %v907 = vmax.f32 %v859, 0.0
        %v908 = vmax.f32 %v864, 0.0
        %v909 = vmax.f32 %v867, 0.0
        %v910 = vmax.f32 %v872, 0.0
        %v911 = vmax.f32 %v875, 0.0
        %v912 = vmax.f32 %v880, 0.0
        %v913 = vmax.f32 %v883, 0.0
        %v914 = vmax.f32 %v888, 0.0
        %v915 = vmax.f32 %v891, 0.0
        %v916 = vmax.f32 %v896, 0.0
        %v917 = vmax.f32 %v899, 0.0
        %v918 = vpack.c.bf16 %v903, %v902
        %v919 = vpack.c.bf16 %v905, %v904
        %v920 = vpack.c.bf16 %v907, %v906
        %v921 = vpack.c.bf16 %v909, %v908
        %v922 = vpack.c.bf16 %v911, %v910
        %v923 = vpack.c.bf16 %v913, %v912
        %v924 = vpack.c.bf16 %v915, %v914
        %v925 = vpack.c.bf16 %v917, %v916
        %s926 = sshra.s32 %s300, 4
        %s927 = sand.u32 %s300, 15
        %s928 = smul.addr %s926, 8
        %s929 = scalar_lea.vmem [#allocation2], %s928
        %930 = vst [vmem:[%s929] sm:$0xff] %v918
        %931 = vst [vmem:[%s929 + $0x8] sm:$0xff] %v919
        %932 = vst [vmem:[%s929 + $0x10] sm:$0xff] %v920
        %933 = vst [vmem:[%s929 + $0x18] sm:$0xff] %v921
        %934 = vst [vmem:[%s929 + $0x20] sm:$0xff] %v922
        %935 = vst [vmem:[%s929 + $0x28] sm:$0xff] %v923
        %936 = vst [vmem:[%s929 + $0x30] sm:$0xff] %v924
        %937 = vst [vmem:[%s929 + $0x38] sm:$0xff] %v925
      $region52: #{graphsage_forward.1} parent=47 // pred_fallthru
        _
      %p938 = scmp.eq.s32.totalorder %s22, 1
      // Predicated region
      $region53: #{graphsage_forward.1} parent=47 // pred_check
        %p939 = pneg %p938
      $region54: #{graphsage_forward.1} parent=47 // pred_check_branch
        %941 = sbr.rel (%p939) target = $region56
      $region55: #{graphsage_forward.1} parent=47 // pred_region
        %s942 = sshra.s32 %s300, 4
        %s943 = sand.u32 %s300, 15
        %s944 = smul.addr %s942, 8
        %s945 = scalar_lea.vmem [#allocation2], %s944
        %v946 = vld [vmem:[%s945] sm:$0xff]
        %v947 = vld [vmem:[%s945 + $0x8] sm:$0xff]
        %v948 = vld [vmem:[%s945 + $0x10] sm:$0xff]
        %v949 = vld [vmem:[%s945 + $0x18] sm:$0xff]
        %v950 = vld [vmem:[%s945 + $0x20] sm:$0xff]
        %v951 = vld [vmem:[%s945 + $0x28] sm:$0xff]
        %v952 = vld [vmem:[%s945 + $0x30] sm:$0xff]
        %v953 = vld [vmem:[%s945 + $0x38] sm:$0xff]
        %v954 = vld [vmem:[#allocation2] sm:$0xff]
        %v955 = vld [vmem:[#allocation2 + $0x8] sm:$0xff]
        %v956 = vld [vmem:[#allocation2 + $0x10] sm:$0xff]
        %v957 = vld [vmem:[#allocation2 + $0x18] sm:$0xff]
        %v958 = vld [vmem:[#allocation2 + $0x20] sm:$0xff]
        %v959 = vld [vmem:[#allocation2 + $0x28] sm:$0xff]
        %v960 = vld [vmem:[#allocation2 + $0x30] sm:$0xff]
        %v961 = vld [vmem:[#allocation2 + $0x38] sm:$0xff]
        %962 = vmatprep.subr.bf16.mxu0 0
        %963 = vmatpush1.bf16.msra.mxu0 %v954
        %964 = vmatprep.subr.bf16.mxu0 0
        %965 = vmatpush1.bf16.msra.mxu0 %v955
        %966 = vmatprep.subr.bf16.mxu0 0
        %967 = vmatpush1.bf16.msra.mxu0 %v956
        %968 = vmatprep.subr.bf16.mxu0 0
        %969 = vmatpush1.bf16.msra.mxu0 %v957
        %970 = vmatprep.subr.bf16.mxu0 0
        %971 = vmatpush1.bf16.msra.mxu0 %v958
        %972 = vmatprep.subr.bf16.mxu0 0
        %973 = vmatpush1.bf16.msra.mxu0 %v959
        %974 = vmatprep.subr.bf16.mxu0 0
        %975 = vmatpush1.bf16.msra.mxu0 %v960
        %976 = vmatprep.subr.bf16.mxu0 0
        %977 = vmatpush1.bf16.msra.mxu0 %v961
        %978 = vmatprep.subr.bf16.mxu0 0
        %979 = vmatpush1.bf16.msra.mxu0 0
        %980 = vmatprep.subr.bf16.mxu0 0
        %981 = vmatpush1.bf16.msra.mxu0 0
        %982 = vmatprep.subr.bf16.mxu0 0
        %983 = vmatpush1.bf16.msra.mxu0 0
        %984 = vmatprep.subr.bf16.mxu0 0
        %985 = vmatpush1.bf16.msra.mxu0 0
        %986 = vmatprep.subr.bf16.mxu0 0
        %987 = vmatpush1.bf16.msra.mxu0 0
        %988 = vmatprep.subr.bf16.mxu0 0
        %989 = vmatpush1.bf16.msra.mxu0 0
        %990 = vmatprep.subr.bf16.mxu0 0
        %991 = vmatpush1.bf16.msra.mxu0 0
        %992 = vmatprep.subr.bf16.mxu0 0
        %993 = vmatpush1.bf16.msra.mxu0 0
        %994 = vmatprep.mubr.bf16.mxu0 0
        %995 = vmatmul.mubr.bf16.gmra.mrb[0].mxu0 %v309
        %v996 = vpop.f32.mrb[0].mxu0
        %v997 = vadd.f32 0.0, %v996
        %v998 = vpop.f32.mrb[0].mxu0
        %v999 = vpop.f32.mrb[0].mxu0
        %v1000 = vadd.f32 0.0, %v999
        %v1001 = vpop.f32.mrb[0].mxu0
        %1002 = vmatprep.mubr.bf16.mxu0 0
        %1003 = vmatmul.mubr.bf16.gmra.mrb[0].mxu0 %v310
        %v1004 = vpop.f32.mrb[0].mxu0
        %v1005 = vadd.f32 0.0, %v1004
        %v1006 = vpop.f32.mrb[0].mxu0
        %v1007 = vpop.f32.mrb[0].mxu0
        %v1008 = vadd.f32 0.0, %v1007
        %v1009 = vpop.f32.mrb[0].mxu0
        %1010 = vmatprep.mubr.bf16.mxu0 0
        %1011 = vmatmul.mubr.bf16.gmra.mrb[0].mxu0 %v311
        %v1012 = vpop.f32.mrb[0].mxu0
        %v1013 = vadd.f32 0.0, %v1012
        %v1014 = vpop.f32.mrb[0].mxu0
        %v1015 = vpop.f32.mrb[0].mxu0
        %v1016 = vadd.f32 0.0, %v1015
        %v1017 = vpop.f32.mrb[0].mxu0
        %1018 = vmatprep.mubr.bf16.mxu0 0
        %1019 = vmatmul.mubr.bf16.gmra.mrb[0].mxu0 %v312
        %v1020 = vpop.f32.mrb[0].mxu0
        %v1021 = vadd.f32 0.0, %v1020
        %v1022 = vpop.f32.mrb[0].mxu0
        %v1023 = vpop.f32.mrb[0].mxu0
        %v1024 = vadd.f32 0.0, %v1023
        %v1025 = vpop.f32.mrb[0].mxu0
        %1026 = vmatprep.mubr.bf16.mxu0 0
        %1027 = vmatmul.mubr.bf16.gmra.mrb[0].mxu0 %v313
        %v1028 = vpop.f32.mrb[0].mxu0
        %v1029 = vadd.f32 0.0, %v1028
        %v1030 = vpop.f32.mrb[0].mxu0
        %v1031 = vpop.f32.mrb[0].mxu0
        %v1032 = vadd.f32 0.0, %v1031
        %v1033 = vpop.f32.mrb[0].mxu0
        %1034 = vmatprep.mubr.bf16.mxu0 0
        %1035 = vmatmul.mubr.bf16.gmra.mrb[0].mxu0 %v314
        %v1036 = vpop.f32.mrb[0].mxu0
        %v1037 = vadd.f32 0.0, %v1036
        %v1038 = vpop.f32.mrb[0].mxu0
        %v1039 = vpop.f32.mrb[0].mxu0
        %v1040 = vadd.f32 0.0, %v1039
        %v1041 = vpop.f32.mrb[0].mxu0
        %1042 = vmatprep.mubr.bf16.mxu0 0
        %1043 = vmatmul.mubr.bf16.gmra.mrb[0].mxu0 %v315
        %v1044 = vpop.f32.mrb[0].mxu0
        %v1045 = vadd.f32 0.0, %v1044
        %v1046 = vpop.f32.mrb[0].mxu0
        %v1047 = vpop.f32.mrb[0].mxu0
        %v1048 = vadd.f32 0.0, %v1047
        %v1049 = vpop.f32.mrb[0].mxu0
        %1050 = vmatprep.mubr.bf16.mxu0 0
        %1051 = vmatmul.mubr.bf16.gmra.mrb[0].mxu0 %v316
        %v1052 = vpop.f32.mrb[0].mxu0
        %v1053 = vadd.f32 0.0, %v1052
        %v1054 = vpop.f32.mrb[0].mxu0
        %v1055 = vpop.f32.mrb[0].mxu0
        %v1056 = vadd.f32 0.0, %v1055
        %v1057 = vpop.f32.mrb[0].mxu0
        %1058 = vdwg.mxu0
        %1060 = vset.pattern.permute.xlu0 0
        %1061 = vperm.xlu0 %1060, %v317
        %v1062 = vpop.permute.xlu0 %1061
        %1065 = vset.pattern.permute.xlu0 0
        %1066 = vperm.xlu0 %1065, %v318
        %v1067 = vpop.permute.xlu0 %1066
        %1070 = vset.pattern.permute.xlu0 0
        %1071 = vperm.xlu0 %1070, %v319
        %v1072 = vpop.permute.xlu0 %1071
        %1075 = vset.pattern.permute.xlu0 0
        %1076 = vperm.xlu0 %1075, %v320
        %v1077 = vpop.permute.xlu0 %1076
        %1080 = vset.pattern.permute.xlu0 0
        %1081 = vperm.xlu0 %1080, %v321
        %v1082 = vpop.permute.xlu0 %1081
        %1085 = vset.pattern.permute.xlu0 0
        %1086 = vperm.xlu0 %1085, %v322
        %v1087 = vpop.permute.xlu0 %1086
        %1090 = vset.pattern.permute.xlu0 0
        %1091 = vperm.xlu0 %1090, %v323
        %v1092 = vpop.permute.xlu0 %1091
        %1095 = vset.pattern.permute.xlu0 0
        %1096 = vperm.xlu0 %1095, %v324
        %v1097 = vpop.permute.xlu0 %1096
        %1100 = vset.pattern.permute.xlu0 0
        %1101 = vperm.xlu0 %1100, %v325
        %v1102 = vpop.permute.xlu0 %1101
        %1105 = vset.pattern.permute.xlu0 0
        %1106 = vperm.xlu0 %1105, %v326
        %v1107 = vpop.permute.xlu0 %1106
        %1110 = vset.pattern.permute.xlu0 0
        %1111 = vperm.xlu0 %1110, %v327
        %v1112 = vpop.permute.xlu0 %1111
        %1115 = vset.pattern.permute.xlu0 0
        %1116 = vperm.xlu0 %1115, %v328
        %v1117 = vpop.permute.xlu0 %1116
        %1120 = vset.pattern.permute.xlu0 0
        %1121 = vperm.xlu0 %1120, %v329
        %v1122 = vpop.permute.xlu0 %1121
        %1125 = vset.pattern.permute.xlu0 0
        %1126 = vperm.xlu0 %1125, %v330
        %v1127 = vpop.permute.xlu0 %1126
        %1130 = vset.pattern.permute.xlu0 0
        %1131 = vperm.xlu0 %1130, %v331
        %v1132 = vpop.permute.xlu0 %1131
        %1135 = vset.pattern.permute.xlu0 0
        %1136 = vperm.xlu0 %1135, %v332
        %v1137 = vpop.permute.xlu0 %1136
        %v1139 = vmul.f32 %v997, %v1062
        %v1140 = vmul.f32 %v1000, %v1067
        %v1141 = vmul.f32 %v1005, %v1072
        %v1142 = vmul.f32 %v1008, %v1077
        %v1143 = vmul.f32 %v1013, %v1082
        %v1144 = vmul.f32 %v1016, %v1087
        %v1145 = vmul.f32 %v1021, %v1092
        %v1146 = vmul.f32 %v1024, %v1097
        %v1147 = vmul.f32 %v1029, %v1102
        %v1148 = vmul.f32 %v1032, %v1107
        %v1149 = vmul.f32 %v1037, %v1112
        %v1150 = vmul.f32 %v1040, %v1117
        %v1151 = vmul.f32 %v1045, %v1122
        %v1152 = vmul.f32 %v1048, %v1127
        %v1153 = vmul.f32 %v1053, %v1132
        %v1154 = vmul.f32 %v1056, %v1137
        %v1155 = vpack.c.bf16 %v1140, %v1139
        %v1156 = vpack.c.bf16 %v1142, %v1141
        %v1157 = vpack.c.bf16 %v1144, %v1143
        %v1158 = vpack.c.bf16 %v1146, %v1145
        %v1159 = vpack.c.bf16 %v1148, %v1147
        %v1160 = vpack.c.bf16 %v1150, %v1149
        %v1161 = vpack.c.bf16 %v1152, %v1151
        %v1162 = vpack.c.bf16 %v1154, %v1153
        %v1163 = vld [vmem:[%s5] sm:$0xf]
        %v1164 = vld [vmem:[%s5 + $0x4] sm:$0xf]
        %v1165 = vld [vmem:[%s5 + $0x8] sm:$0xf]
        %v1166 = vld [vmem:[%s5 + $0xc] sm:$0xf]
        %v1167 = vld [vmem:[%s5 + $0x10] sm:$0xf]
        %v1168 = vld [vmem:[%s5 + $0x14] sm:$0xf]
        %v1169 = vld [vmem:[%s5 + $0x18] sm:$0xf]
        %v1170 = vld [vmem:[%s5 + $0x1c] sm:$0xf]
        %v1171 = vld [vmem:[%s5 + $0x20] sm:$0xf]
        %v1172 = vld [vmem:[%s5 + $0x24] sm:$0xf]
        %v1173 = vld [vmem:[%s5 + $0x28] sm:$0xf]
        %v1174 = vld [vmem:[%s5 + $0x2c] sm:$0xf]
        %v1175 = vld [vmem:[%s5 + $0x30] sm:$0xf]
        %v1176 = vld [vmem:[%s5 + $0x34] sm:$0xf]
        %v1177 = vld [vmem:[%s5 + $0x38] sm:$0xf]
        %v1178 = vld [vmem:[%s5 + $0x3c] sm:$0xf]
        %v1179 = vld [vmem:[%s5 + $0x40] sm:$0xf]
        %v1180 = vld [vmem:[%s5 + $0x44] sm:$0xf]
        %v1181 = vld [vmem:[%s5 + $0x48] sm:$0xf]
        %v1182 = vld [vmem:[%s5 + $0x4c] sm:$0xf]
        %v1183 = vld [vmem:[%s5 + $0x50] sm:$0xf]
        %v1184 = vld [vmem:[%s5 + $0x54] sm:$0xf]
        %v1185 = vld [vmem:[%s5 + $0x58] sm:$0xf]
        %v1186 = vld [vmem:[%s5 + $0x5c] sm:$0xf]
        %v1187 = vld [vmem:[%s5 + $0x60] sm:$0xf]
        %v1188 = vld [vmem:[%s5 + $0x64] sm:$0xf]
        %v1189 = vld [vmem:[%s5 + $0x68] sm:$0xf]
        %v1190 = vld [vmem:[%s5 + $0x6c] sm:$0xf]
        %v1191 = vld [vmem:[%s5 + $0x70] sm:$0xf]
        %v1192 = vld [vmem:[%s5 + $0x74] sm:$0xf]
        %v1193 = vld [vmem:[%s5 + $0x78] sm:$0xf]
        %v1194 = vld [vmem:[%s5 + $0x7c] sm:$0xf]
        %v1195 = vld [vmem:[%s6] sm:$0x1]
        %v1197 = vlaneseq
        %v1198 = vshrl.u32 %v1197, 7
        %v1199 = vsub.s32 0, %v1198
        %v1200 = vrot.slane %v1195, %v1199
        %v1234 = vunpack.c.l.b16 %v1163
        %v1235 = vunpack.c.l.b16 %v1164
        %v1236 = vunpack.c.l.b16 %v1165
        %v1237 = vunpack.c.l.b16 %v1166
        %v1238 = vunpack.c.l.b16 %v1167
        %v1239 = vunpack.c.l.b16 %v1168
        %v1240 = vunpack.c.l.b16 %v1169
        %v1241 = vunpack.c.l.b16 %v1170
        %v1242 = vunpack.c.l.b16 %v1171
        %v1243 = vunpack.c.l.b16 %v1172
        %v1244 = vunpack.c.l.b16 %v1173
        %v1245 = vunpack.c.l.b16 %v1174
        %v1246 = vunpack.c.l.b16 %v1175
        %v1247 = vunpack.c.l.b16 %v1176
        %v1248 = vunpack.c.l.b16 %v1177
        %v1249 = vunpack.c.l.b16 %v1178
        %v1250 = vunpack.c.l.b16 %v1179
        %v1251 = vunpack.c.l.b16 %v1180
        %v1252 = vunpack.c.l.b16 %v1181
        %v1253 = vunpack.c.l.b16 %v1182
        %v1254 = vunpack.c.l.b16 %v1183
        %v1255 = vunpack.c.l.b16 %v1184
        %v1256 = vunpack.c.l.b16 %v1185
        %v1257 = vunpack.c.l.b16 %v1186
        %v1258 = vunpack.c.l.b16 %v1187
        %v1259 = vunpack.c.l.b16 %v1188
        %v1260 = vunpack.c.l.b16 %v1189
        %v1261 = vunpack.c.l.b16 %v1190
        %v1262 = vunpack.c.l.b16 %v1191
        %v1263 = vunpack.c.l.b16 %v1192
        %v1264 = vunpack.c.l.b16 %v1193
        %v1265 = vunpack.c.l.b16 %v1194
        %v1266 = vpack.c.b16 %v1235, %v1234
        %v1267 = vpack.c.b16 %v1237, %v1236
        %v1268 = vpack.c.b16 %v1239, %v1238
        %v1269 = vpack.c.b16 %v1241, %v1240
        %v1270 = vpack.c.b16 %v1243, %v1242
        %v1271 = vpack.c.b16 %v1245, %v1244
        %v1272 = vpack.c.b16 %v1247, %v1246
        %v1273 = vpack.c.b16 %v1249, %v1248
        %v1274 = vpack.c.b16 %v1251, %v1250
        %v1275 = vpack.c.b16 %v1253, %v1252
        %v1276 = vpack.c.b16 %v1255, %v1254
        %v1277 = vpack.c.b16 %v1257, %v1256
        %v1278 = vpack.c.b16 %v1259, %v1258
        %v1279 = vpack.c.b16 %v1261, %v1260
        %v1280 = vpack.c.b16 %v1263, %v1262
        %v1281 = vpack.c.b16 %v1265, %v1264
        %1298 = vmatprep.subr.bf16.mxu0 0
        %1299 = vmatpush1.bf16.msra.mxu0 %v1266
        %1300 = vmatprep.subr.bf16.mxu0 0
        %1301 = vmatpush1.bf16.msra.mxu0 %v1267
        %1302 = vmatprep.subr.bf16.mxu0 0
        %1303 = vmatpush1.bf16.msra.mxu0 %v1268
        %1304 = vmatprep.subr.bf16.mxu0 0
        %1305 = vmatpush1.bf16.msra.mxu0 %v1269
        %1306 = vmatprep.subr.bf16.mxu0 0
        %1307 = vmatpush1.bf16.msra.mxu0 %v1270
        %1308 = vmatprep.subr.bf16.mxu0 0
        %1309 = vmatpush1.bf16.msra.mxu0 %v1271
        %1310 = vmatprep.subr.bf16.mxu0 0
        %1311 = vmatpush1.bf16.msra.mxu0 %v1272
        %1312 = vmatprep.subr.bf16.mxu0 0
        %1313 = vmatpush1.bf16.msra.mxu0 %v1273
        %1314 = vmatprep.subr.bf16.mxu0 0
        %1315 = vmatpush1.bf16.msra.mxu0 %v1274
        %1316 = vmatprep.subr.bf16.mxu0 0
        %1317 = vmatpush1.bf16.msra.mxu0 %v1275
        %1318 = vmatprep.subr.bf16.mxu0 0
        %1319 = vmatpush1.bf16.msra.mxu0 %v1276
        %1320 = vmatprep.subr.bf16.mxu0 0
        %1321 = vmatpush1.bf16.msra.mxu0 %v1277
        %1322 = vmatprep.subr.bf16.mxu0 0
        %1323 = vmatpush1.bf16.msra.mxu0 %v1278
        %1324 = vmatprep.subr.bf16.mxu0 0
        %1325 = vmatpush1.bf16.msra.mxu0 %v1279
        %1326 = vmatprep.subr.bf16.mxu0 0
        %1327 = vmatpush1.bf16.msra.mxu0 %v1280
        %1328 = vmatprep.subr.bf16.mxu0 0
        %1329 = vmatpush1.bf16.msra.mxu0 %v1281
        %1330 = vmatprep.mubr.bf16.mxu0 %v946
        %1331 = vmatmul.mubr.bf16.gmra.mrb[0].mxu0 %v1155
        %v1332 = vpop.f32.mrb[0].mxu0
        %v1333 = vadd.f32 %v1200, %v1332
        %v1334 = vpop.f32.mrb[0].mxu0
        %v1335 = vpop.f32.mrb[0].mxu0
        %v1336 = vadd.f32 %v1200, %v1335
        %v1337 = vpop.f32.mrb[0].mxu0
        %1338 = vmatprep.mubr.bf16.mxu0 %v947
        %1339 = vmatmul.mubr.bf16.gmra.mrb[0].mxu0 %v1156
        %v1340 = vpop.f32.mrb[0].mxu0
        %v1341 = vadd.f32 %v1200, %v1340
        %v1342 = vpop.f32.mrb[0].mxu0
        %v1343 = vpop.f32.mrb[0].mxu0
        %v1344 = vadd.f32 %v1200, %v1343
        %v1345 = vpop.f32.mrb[0].mxu0
        %1346 = vmatprep.mubr.bf16.mxu0 %v948
        %1347 = vmatmul.mubr.bf16.gmra.mrb[0].mxu0 %v1157
        %v1348 = vpop.f32.mrb[0].mxu0
        %v1349 = vadd.f32 %v1200, %v1348
        %v1350 = vpop.f32.mrb[0].mxu0
        %v1351 = vpop.f32.mrb[0].mxu0
        %v1352 = vadd.f32 %v1200, %v1351
        %v1353 = vpop.f32.mrb[0].mxu0
        %1354 = vmatprep.mubr.bf16.mxu0 %v949
        %1355 = vmatmul.mubr.bf16.gmra.mrb[0].mxu0 %v1158
        %v1356 = vpop.f32.mrb[0].mxu0
        %v1357 = vadd.f32 %v1200, %v1356
        %v1358 = vpop.f32.mrb[0].mxu0
        %v1359 = vpop.f32.mrb[0].mxu0
        %v1360 = vadd.f32 %v1200, %v1359
        %v1361 = vpop.f32.mrb[0].mxu0
        %1362 = vmatprep.mubr.bf16.mxu0 %v950
        %1363 = vmatmul.mubr.bf16.gmra.mrb[0].mxu0 %v1159
        %v1364 = vpop.f32.mrb[0].mxu0
        %v1365 = vadd.f32 %v1200, %v1364
        %v1366 = vpop.f32.mrb[0].mxu0
        %v1367 = vpop.f32.mrb[0].mxu0
        %v1368 = vadd.f32 %v1200, %v1367
        %v1369 = vpop.f32.mrb[0].mxu0
        %1370 = vmatprep.mubr.bf16.mxu0 %v951
        %1371 = vmatmul.mubr.bf16.gmra.mrb[0].mxu0 %v1160
        %v1372 = vpop.f32.mrb[0].mxu0
        %v1373 = vadd.f32 %v1200, %v1372
        %v1374 = vpop.f32.mrb[0].mxu0
        %v1375 = vpop.f32.mrb[0].mxu0
        %v1376 = vadd.f32 %v1200, %v1375
        %v1377 = vpop.f32.mrb[0].mxu0
        %1378 = vmatprep.mubr.bf16.mxu0 %v952
        %1379 = vmatmul.mubr.bf16.gmra.mrb[0].mxu0 %v1161
        %v1380 = vpop.f32.mrb[0].mxu0
        %v1381 = vadd.f32 %v1200, %v1380
        %v1382 = vpop.f32.mrb[0].mxu0
        %v1383 = vpop.f32.mrb[0].mxu0
        %v1384 = vadd.f32 %v1200, %v1383
        %v1385 = vpop.f32.mrb[0].mxu0
        %1386 = vmatprep.mubr.bf16.mxu0 %v953
        %1387 = vmatmul.mubr.bf16.gmra.mrb[0].mxu0 %v1162
        %v1388 = vpop.f32.mrb[0].mxu0
        %v1389 = vadd.f32 %v1200, %v1388
        %v1390 = vpop.f32.mrb[0].mxu0
        %v1391 = vpop.f32.mrb[0].mxu0
        %v1392 = vadd.f32 %v1200, %v1391
        %v1393 = vpop.f32.mrb[0].mxu0
        %1394 = vdwg.mxu0
        %1395 = vst [vmem:[%s296] sm:$0xff] %v1333
        %1396 = vst [vmem:[%s296 + $0x8] sm:$0xff] %v1336
        %1397 = vst [vmem:[%s296 + $0x10] sm:$0xff] %v1341
        %1398 = vst [vmem:[%s296 + $0x18] sm:$0xff] %v1344
        %1399 = vst [vmem:[%s296 + $0x20] sm:$0xff] %v1349
        %1400 = vst [vmem:[%s296 + $0x28] sm:$0xff] %v1352
        %1401 = vst [vmem:[%s296 + $0x30] sm:$0xff] %v1357
        %1402 = vst [vmem:[%s296 + $0x38] sm:$0xff] %v1360
        %1403 = vst [vmem:[%s296 + $0x40] sm:$0xff] %v1365
        %1404 = vst [vmem:[%s296 + $0x48] sm:$0xff] %v1368
        %1405 = vst [vmem:[%s296 + $0x50] sm:$0xff] %v1373
        %1406 = vst [vmem:[%s296 + $0x58] sm:$0xff] %v1376
        %1407 = vst [vmem:[%s296 + $0x60] sm:$0xff] %v1381
        %1408 = vst [vmem:[%s296 + $0x68] sm:$0xff] %v1384
        %1409 = vst [vmem:[%s296 + $0x70] sm:$0xff] %v1389
        %1410 = vst [vmem:[%s296 + $0x78] sm:$0xff] %v1392
      $region56: #{graphsage_forward.1} parent=47 // pred_fallthru
        _
      %s1411 = smul.u32 %s22, %s23
      %s1412 = smul.u32 16, %s1411
      %p1413 = scmp.lt.s32.totalorder %s1412, 15
      %s1414 = scalar_select %p1413, %s1412, 15
      %s1415 = smul.addr %s1414, 8
      %s1416 = scalar_lea.vmem %s7, %s1415
      // Predicated region
      $region57: #{graphsage_forward.1} parent=47 // pred_check
        %p1417 = pneg %p202
      $region58: #{graphsage_forward.1} parent=47 // pred_check_branch
        %1419 = sbr.rel (%p1417) target = $region60
      $region59: #{graphsage_forward.1} parent=47 // pred_region
        %s1420 = smul.u32 %s22, %s23
        %s1421 = smul.u32 16, %s1420
      $region60: #{graphsage_forward.1} parent=47 // pred_fallthru
        _
    $region48: #{graphsage_forward.1} parent=5 // pred_fallthru
      _
    %p1422 = scmp.le.s32.totalorder 2, %s13
    // Predicated region
    $region61: #{graphsage_forward.1} parent=5 // pred_check
      %p1423 = pneg %p1422
    $region62: #{graphsage_forward.1} parent=5 // pred_check_branch
      %1425 = sbr.rel (%p1423) target = $region64
    $region63: #{graphsage_forward.1} parent=5 // pred_region
      %s1426 = ssub.s32 %s13, 2
      // Predicated region
      $region65: #{graphsage_forward.1} parent=63 // pred_check
        %p1427 = pneg %p208
      $region66: #{graphsage_forward.1} parent=63 // pred_check_branch
        %1429 = sbr.rel (%p1427) target = $region68
      $region67: #{graphsage_forward.1} parent=63 // pred_region
        %s1430 = smul.u32 %s24, %s25
        %s1431 = smul.u32 16, %s1430
        %p1432 = scmp.lt.s32.totalorder %s1431, 15
        %s1433 = scalar_select %p1432, %s1431, 15
        %s1434 = smul.addr %s1433, 8
        %s1435 = scalar_lea.vmem %s7, %s1434
      $region68: #{graphsage_forward.1} parent=63 // pred_fallthru
        _
    $region64: #{graphsage_forward.1} parent=5 // pred_fallthru
      _
  $region6: #{graphsage_forward.1} parent=0 // loop_footer
    %s17 = sadd.s32 1, %s13
  $region7: #{graphsage_forward.1} parent=0 // loop_footer_branch
    %12 = sbr.rel target = $region3
  $region8: #{graphsage_forward.1} parent=0 // loop_exit
    _

</llo_original>
